<compile_context>
chip_gen: v5e
topology: v5e:2x2
jax: 0.10.0
libtpu: 0.0.40
codegen_flags: <defaults>
</compile_context>

<pallas_src>
import functools
import math

import jax
import jax.numpy as jnp
import numpy as np
from jax.experimental import pallas as pl
from jax.experimental.pallas import tpu as pltpu


# ----------------------------- shared math helpers -----------------------------
def _silu(x):
    return x * jax.nn.sigmoid(x)


def _layer_norm(x, g, b, eps=1e-5):
    mu = jnp.mean(x, axis=-1, keepdims=True)
    var = jnp.mean((x - mu) ** 2, axis=-1, keepdims=True)
    return (x - mu) * jax.lax.rsqrt(var + eps) * g + b


def _gru_cell_ref(x, h, w_ih, w_hh, b_ih, b_hh, hidden):
    # PyTorch nn.GRUCell semantics, gate order [r, z, n] (pure-JAX reference path).
    gi = x @ w_ih + b_ih
    gh = h @ w_hh + b_hh
    r = jax.nn.sigmoid(gi[:, :hidden] + gh[:, :hidden])
    z = jax.nn.sigmoid(gi[:, hidden:2 * hidden] + gh[:, hidden:2 * hidden])
    n = jnp.tanh(gi[:, 2 * hidden:] + r * gh[:, 2 * hidden:])
    return (1.0 - z) * n + z * h


# --------------------------------- Pallas kernel --------------------------------
def simple_tr_layer_kernel(
    main_ref, seq_ref,
    ln_mg_ref, ln_mb_ref, ln_sg_ref, ln_sb_ref,
    wq_ref, bq_ref, wk_ref, bk_ref, wv_ref, bv_ref,
    hmask_ref, hmask_t_ref,
    w_out_ref, b_out_ref,
    ln_pg_ref, ln_pb_ref, w_mlp_ref, b_mlp_ref,
    wih0_ref, whh0_ref, bih0_ref, bhh0_ref,
    wih1_ref, whh1_ref, bih1_ref, bhh1_ref,
    out_ref,
    *, TB, NU, H, num_heads,
):
    E = H  # num_heads * emb_size == hidden_size (asserted by the wrapper)

    def mm(a, w_ref, b_ref=None):
        # bf16 (or f32) MXU matmul with f32 accumulation; bias added in f32.
        w = w_ref[...]
        out = jnp.dot(a.astype(w.dtype), w, preferred_element_type=jnp.float32)
        return out if b_ref is None else out + b_ref[...]

    def gru_cell(x, h, wih_ref, whh_ref, bih_ref, bhh_ref):
        # Exact PyTorch GRUCell: two un-padded matmuls, gates [r, z, n] in f32.
        gi = mm(x, wih_ref, bih_ref)                                     # (TB, 3H)
        gh = mm(h, whh_ref, bhh_ref)                                     # (TB, 3H)
        r = jax.nn.sigmoid(gi[:, :H] + gh[:, :H])
        z = jax.nn.sigmoid(gi[:, H:2 * H] + gh[:, H:2 * H])
        n = jnp.tanh(gi[:, 2 * H:] + r * gh[:, 2 * H:])
        return (1.0 - z) * n + z * h

    main = main_ref[...]           # (TB, H)      f32
    seq = seq_ref[...]             # (TB*NU, H)   f32, row = b * NU + nu

    # ------------------------- attention (fused projections) -------------------------
    # Q = LN(main) @ (wq . w_in_q) * 1/sqrt(d)  -- fusion + scale pre-folded in wrapper.
    q = mm(_layer_norm(main, ln_mg_ref[...], ln_mb_ref[...]), wq_ref, bq_ref)   # (TB, E)
    ln_seq = _layer_norm(seq, ln_sg_ref[...], ln_sb_ref[...])
    k = mm(ln_seq, wk_ref, bk_ref)                                              # (TB*NU, E)
    v = mm(ln_seq, wv_ref, bv_ref)                                              # (TB*NU, E)

    k3 = k.reshape(TB, NU, E)
    v3 = v.reshape(TB, NU, E)

    # Per-head scores: elementwise q*k, then sum within each head block via a tiny
    # exact matmul against the static f32 head mask (E, nh) -- no lane-dim splits.
    qk = q[:, None, :] * k3                                                     # (TB, NU, E)
    s = jnp.dot(qk.reshape(TB * NU, E), hmask_ref[...],
                preferred_element_type=jnp.float32)                             # (TB*NU, nh)
    s3 = s.reshape(TB, NU, num_heads)

    # Softmax over NU per head (f32); approx reciprocal runs on the otherwise-idle EUP.
    s3 = s3 - jnp.max(s3, axis=1, keepdims=True)
    p = jnp.exp(s3)
    p = p * pl.reciprocal(jnp.sum(p, axis=1, keepdims=True), approx=True)       # (TB, NU, nh)

    # Broadcast each head prob across its emb lanes via the transposed mask, reduce NU.
    p_exp = jnp.dot(p.reshape(TB * NU, num_heads), hmask_t_ref[...],
                    preferred_element_type=jnp.float32)                         # (TB*NU, E)
    attn = jnp.sum(p_exp.reshape(TB, NU, E) * v3, axis=1)                       # (TB, E)

    # out_proj + SiLU  (matches `silu(self.attn(...)[0])` in the module)
    x1 = _silu(mm(attn, w_out_ref, b_out_ref))                                  # (TB, H)

    # ------------------------- GRU[0], MLP, GRU[1] -------------------------
    h1 = gru_cell(x1, main, wih0_ref, whh0_ref, bih0_ref, bhh0_ref)
    x2 = _silu(mm(_layer_norm(h1, ln_pg_ref[...], ln_pb_ref[...]), w_mlp_ref, b_mlp_ref))
    h2 = gru_cell(x2, h1, wih1_ref, whh1_ref, bih1_ref, bhh1_ref)

    out_ref[...] = h2


# ------------------------- wrapper-side weight pre-composition -------------------------
def _fuse_params(params, hidden, num_heads, emb_size, matmul_dtype):
    (ln_main_g, ln_main_b, ln_seq_g, ln_seq_b, wq, bq, wkv, bkv,
     w_in, b_in, w_out, b_out, ln_mlp_g, ln_mlp_b, w_mlp, b_mlp,
     wih0, whh0, bih0, bhh0, wih1, whh1, bih1, bhh1) = params
    E = num_heads * emb_size
    scale = 1.0 / math.sqrt(emb_size)

    # Fold main_q_linear into in_proj-Q (plus the 1/sqrt(d) attention scale);
    # fold seq_kv_linear's K half into in_proj-K and V half into in_proj-V.
    # All composition is done in f32, then quantized once to matmul_dtype.
    wq_f = (wq @ w_in[:, :E]) * scale
    bq_f = (bq @ w_in[:, :E] + b_in[:, :E]) * scale
    wk_f = wkv[:, :E] @ w_in[:, E:2 * E]
    bk_f = bkv[:, :E] @ w_in[:, E:2 * E] + b_in[:, E:2 * E]
    wv_f = wkv[:, E:] @ w_in[:, 2 * E:]
    bv_f = bkv[:, E:] @ w_in[:, 2 * E:] + b_in[:, 2 * E:]

    # Static head-block indicator (E, nh) and its transpose -- kept in f32 (exact 0/1).
    hmask = (jnp.arange(E)[:, None] // emb_size
             == jnp.arange(num_heads)[None, :]).astype(jnp.float32)
    hmask_t = hmask.T

    cast = lambda w: w.astype(matmul_dtype)   # weights only; biases/LN params stay f32

    return (ln_main_g, ln_main_b, ln_seq_g, ln_seq_b,
            cast(wq_f), bq_f, cast(wk_f), bk_f, cast(wv_f), bv_f,
            hmask, hmask_t,
            cast(w_out), b_out,
            ln_mlp_g, ln_mlp_b, cast(w_mlp), b_mlp,
            cast(wih0), cast(whh0), bih0, bhh0,
            cast(wih1), cast(whh1), bih1, bhh1)


# ----------------------------------- wrapper -----------------------------------
def simple_tr_layer(main, seq, params, *, num_heads, emb_size,
                    block_b=None, matmul_dtype=jnp.bfloat16, megacore=False):
    B, NU, H = seq.shape
    E = num_heads * emb_size
    assert E == H, "forward() asserts attention output shape == main shape"
    assert main.shape == (B, H)

    # Default: whole batch in one grid step (overhead-bound regime at small shapes).
    # Only tile the batch (block_b) when activations+weights pressure VMEM, or for
    # v7x megacore sharding (megacore=True).
    TB = B if block_b is None else block_b
    assert B % TB == 0 and (TB == B or TB % 8 == 0), "batch tile must be 8-aligned"
    grid = (B // TB,)

    fused = _fuse_params(params, H, num_heads, emb_size, matmul_dtype)
    seq_flat = seq.reshape(B * NU, H)
    args = (main, seq_flat) + fused

    kernel = functools.partial(
        simple_tr_layer_kernel, TB=TB, NU=NU, H=H, num_heads=num_heads,
    )

    in_specs = [
        pl.BlockSpec((TB, H), lambda i: (i, 0)),          # main, tiled over batch
        pl.BlockSpec((TB * NU, H), lambda i: (i, 0)),     # seq, tiled over batch
    ] + [pl.BlockSpec(a.shape, lambda i: (0, 0)) for a in fused]   # weights: resident
    # (When H grows: mark the resident-weight specs pipeline_mode=pl.Buffered(1) and
    #  set vmem_limit_bytes explicitly -- bites v7x's 64 MiB VMEM first.)

    if grid[0] > 1 and megacore:
        # Genuine v7x megacore sharding of the embarrassingly-parallel batch axis.
        dims = (pltpu.CORE_PARALLEL,)
    else:
        dims = (pltpu.ARBITRARY,)

    return pl.pallas_call(
        kernel,
        out_shape=jax.ShapeDtypeStruct((B, H), jnp.float32),
        grid=grid,
        in_specs=in_specs,
        out_specs=pl.BlockSpec((TB, H), lambda i: (i, 0)),
        compiler_params=pltpu.CompilerParams(dimension_semantics=dims),
    )(*args)


# ------------------------------ pure-JAX reference ------------------------------
def reference_forward(main, seq, params, *, num_heads, emb_size):
    (ln_main_g, ln_main_b, ln_seq_g, ln_seq_b, wq, bq, wkv, bkv,
     w_in, b_in, w_out, b_out, ln_mlp_g, ln_mlp_b, w_mlp, b_mlp,
     wih0, whh0, bih0, bhh0, wih1, whh1, bih1, bhh1) = params
    B, NU, H = seq.shape
    E = num_heads * emb_size
    d = emb_size
    seq_flat = seq.reshape(B * NU, H)

    q_lin = _layer_norm(main, ln_main_g, ln_main_b) @ wq + bq
    kv_lin = _layer_norm(seq_flat, ln_seq_g, ln_seq_b) @ wkv + bkv
    k_lin, v_lin = kv_lin[:, :E], kv_lin[:, E:]
    q = q_lin @ w_in[:, :E] + b_in[:, :E]
    k = k_lin @ w_in[:, E:2 * E] + b_in[:, E:2 * E]
    v = v_lin @ w_in[:, 2 * E:] + b_in[:, 2 * E:]

    qh = q.reshape(B, num_heads, d)
    kh = k.reshape(B, NU, num_heads, d)
    vh = v.reshape(B, NU, num_heads, d)
    s = jnp.einsum("bhd,bnhd->bhn", qh, kh) / math.sqrt(d)
    p = jax.nn.softmax(s, axis=-1)
    o = jnp.einsum("bhn,bnhd->bhd", p, vh).reshape(B, E)
    x1 = _silu(o @ w_out + b_out)

    h1 = _gru_cell_ref(x1, main, wih0, whh0, bih0, bhh0, H)
    x2 = _silu(_layer_norm(h1, ln_mlp_g, ln_mlp_b) @ w_mlp + b_mlp)
    h2 = _gru_cell_ref(x2, h1, wih1, whh1, bih1, bhh1, H)
    return h2


# ---------------------------- deterministic parameters ----------------------------
def init_params(key, hidden, num_heads, emb_size):
    E = num_heads * emb_size
    ks = iter(jax.random.split(key, 32))

    def w(shape, scale=0.1):
        return (scale * jax.random.normal(next(ks), shape)).astype(jnp.float32)

    params = (
        jnp.ones((1, hidden), jnp.float32),          # ln_main gamma
        jnp.zeros((1, hidden), jnp.float32),         # ln_main beta
        jnp.ones((1, hidden), jnp.float32),          # ln_seq gamma
        jnp.zeros((1, hidden), jnp.float32),         # ln_seq beta
        w((hidden, E)),                              # main_q_linear weight (in, out)
        w((1, E), 0.05),                             # main_q_linear bias
        w((hidden, 2 * E)),                          # seq_kv_linear weight
        w((1, 2 * E), 0.05),                         # seq_kv_linear bias
        w((E, 3 * E)),                               # attn.in_proj weight (in, out)
        w((1, 3 * E), 0.05),                         # attn.in_proj bias
        w((E, E)),                                   # attn.out_proj weight
        w((1, E), 0.05),                             # attn.out_proj bias
        jnp.ones((1, hidden), jnp.float32),          # mlp LayerNorm gamma
        jnp.zeros((1, hidden), jnp.float32),         # mlp LayerNorm beta
        w((hidden, hidden)),                         # mlp Linear weight
        w((1, hidden), 0.05),                        # mlp Linear bias
        w((hidden, 3 * hidden)),                     # gru0 weight_ih (in, 3H)
        w((hidden, 3 * hidden)),                     # gru0 weight_hh
        w((1, 3 * hidden), 0.05),                    # gru0 bias_ih
        w((1, 3 * hidden), 0.05),                    # gru0 bias_hh
        w((hidden, 3 * hidden)),                     # gru1 weight_ih
        w((hidden, 3 * hidden)),                     # gru1 weight_hh
        w((1, 3 * hidden), 0.05),                    # gru1 bias_ih
        w((1, 3 * hidden), 0.05),                    # gru1 bias_hh
    )
    return params


if __name__ == "__main__":
    hidden_size = 32
    num_heads = 4
    emb_size = 8            # num_heads * emb_size == hidden_size (required by forward)
    B, NU = 16, 8           # whole batch handled in a single grid step

    key = jax.random.PRNGKey(0)
    k_main, k_seq, k_par = jax.random.split(key, 3)
    main = jax.random.normal(k_main, (B, hidden_size), dtype=jnp.float32)
    seq = jax.random.normal(k_seq, (B, NU, hidden_size), dtype=jnp.float32)
    params = init_params(k_par, hidden_size, num_heads, emb_size)

    fwd = functools.partial(simple_tr_layer, num_heads=num_heads, emb_size=emb_size)

    # Default perf path: grid=(1,), bf16 matmul weights/activations, f32 accumulation.
    out = jax.block_until_ready(fwd(main, seq, params))
    # Bit-close path: f32 matmuls (only the approx softmax reciprocal deviates ~1e-3).
    out_f32 = jax.block_until_ready(fwd(main, seq, params, matmul_dtype=jnp.float32))

    ref = jax.block_until_ready(
        reference_forward(main, seq, params, num_heads=num_heads, emb_size=emb_size))

    assert out.shape == (B, hidden_size)
    assert bool(jnp.all(jnp.isfinite(out)))
    # Exact-math check (f32 kernel): fusion, head-mask reduce/broadcast and GRU
    # formulations are exact; headroom only for the approx EUP reciprocal.
    np.testing.assert_allclose(np.asarray(out_f32), np.asarray(ref), atol=2e-3, rtol=2e-3)
    # Mixed-precision default: tolerance covers intentional bf16 weight/activation
    # quantization on the MXU path (elementwise math stays f32).
    np.testing.assert_allclose(np.asarray(out), np.asarray(ref), atol=1e-2, rtol=1e-2)
    print("KERNEL_OK")
</pallas_src>

<mosaic_0001>
module attributes {stable_mosaic.version = 11 : i64} {
  func.func @simple_tr_layer_kernel(%arg0: i32, %arg1: memref<16x32xf32, #tpu.memory_space<vmem>>, %arg2: memref<128x32xf32, #tpu.memory_space<vmem>>, %arg3: memref<1x32xf32, #tpu.memory_space<vmem>>, %arg4: memref<1x32xf32, #tpu.memory_space<vmem>>, %arg5: memref<1x32xf32, #tpu.memory_space<vmem>>, %arg6: memref<1x32xf32, #tpu.memory_space<vmem>>, %arg7: memref<32x32xbf16, #tpu.memory_space<vmem>>, %arg8: memref<1x32xf32, #tpu.memory_space<vmem>>, %arg9: memref<32x32xbf16, #tpu.memory_space<vmem>>, %arg10: memref<1x32xf32, #tpu.memory_space<vmem>>, %arg11: memref<32x32xbf16, #tpu.memory_space<vmem>>, %arg12: memref<1x32xf32, #tpu.memory_space<vmem>>, %arg13: memref<32x4xf32, #tpu.memory_space<vmem>>, %arg14: memref<4x32xf32, #tpu.memory_space<vmem>>, %arg15: memref<32x32xbf16, #tpu.memory_space<vmem>>, %arg16: memref<1x32xf32, #tpu.memory_space<vmem>>, %arg17: memref<1x32xf32, #tpu.memory_space<vmem>>, %arg18: memref<1x32xf32, #tpu.memory_space<vmem>>, %arg19: memref<32x32xbf16, #tpu.memory_space<vmem>>, %arg20: memref<1x32xf32, #tpu.memory_space<vmem>>, %arg21: memref<32x96xbf16, #tpu.memory_space<vmem>>, %arg22: memref<32x96xbf16, #tpu.memory_space<vmem>>, %arg23: memref<1x96xf32, #tpu.memory_space<vmem>>, %arg24: memref<1x96xf32, #tpu.memory_space<vmem>>, %arg25: memref<32x96xbf16, #tpu.memory_space<vmem>>, %arg26: memref<32x96xbf16, #tpu.memory_space<vmem>>, %arg27: memref<1x96xf32, #tpu.memory_space<vmem>>, %arg28: memref<1x96xf32, #tpu.memory_space<vmem>>, %arg29: memref<16x32xf32, #tpu.memory_space<vmem>>) attributes {dimension_semantics = [#tpu.dimension_semantics<arbitrary>], iteration_bounds = array<i64: 1>, scalar_prefetch = 0 : i64, scratch_operands = 0 : i64, tpu.core_type = #tpu.core_type<tc>, window_params = [{transform_indices = @transform_0, window_bounds = array<i64: 16, 32>}, {transform_indices = @transform_1, window_bounds = array<i64: 128, 32>}, {pipeline_mode = #tpu.pipeline_mode<synchronous>, transform_indices = @transform_2, window_bounds = array<i64: 1, 32>}, {pipeline_mode = #tpu.pipeline_mode<synchronous>, transform_indices = @transform_3, window_bounds = array<i64: 1, 32>}, {pipeline_mode = #tpu.pipeline_mode<synchronous>, transform_indices = @transform_4, window_bounds = array<i64: 1, 32>}, {pipeline_mode = #tpu.pipeline_mode<synchronous>, transform_indices = @transform_5, window_bounds = array<i64: 1, 32>}, {pipeline_mode = #tpu.pipeline_mode<synchronous>, transform_indices = @transform_6, window_bounds = array<i64: 32, 32>}, {pipeline_mode = #tpu.pipeline_mode<synchronous>, transform_indices = @transform_7, window_bounds = array<i64: 1, 32>}, {pipeline_mode = #tpu.pipeline_mode<synchronous>, transform_indices = @transform_8, window_bounds = array<i64: 32, 32>}, {pipeline_mode = #tpu.pipeline_mode<synchronous>, transform_indices = @transform_9, window_bounds = array<i64: 1, 32>}, {pipeline_mode = #tpu.pipeline_mode<synchronous>, transform_indices = @transform_10, window_bounds = array<i64: 32, 32>}, {pipeline_mode = #tpu.pipeline_mode<synchronous>, transform_indices = @transform_11, window_bounds = array<i64: 1, 32>}, {pipeline_mode = #tpu.pipeline_mode<synchronous>, transform_indices = @transform_12, window_bounds = array<i64: 32, 4>}, {pipeline_mode = #tpu.pipeline_mode<synchronous>, transform_indices = @transform_13, window_bounds = array<i64: 4, 32>}, {pipeline_mode = #tpu.pipeline_mode<synchronous>, transform_indices = @transform_14, window_bounds = array<i64: 32, 32>}, {pipeline_mode = #tpu.pipeline_mode<synchronous>, transform_indices = @transform_15, window_bounds = array<i64: 1, 32>}, {pipeline_mode = #tpu.pipeline_mode<synchronous>, transform_indices = @transform_16, window_bounds = array<i64: 1, 32>}, {pipeline_mode = #tpu.pipeline_mode<synchronous>, transform_indices = @transform_17, window_bounds = array<i64: 1, 32>}, {pipeline_mode = #tpu.pipeline_mode<synchronous>, transform_indices = @transform_18, window_bounds = array<i64: 32, 32>}, {pipeline_mode = #tpu.pipeline_mode<synchronous>, transform_indices = @transform_19, window_bounds = array<i64: 1, 32>}, {pipeline_mode = #tpu.pipeline_mode<synchronous>, transform_indices = @transform_20, window_bounds = array<i64: 32, 96>}, {pipeline_mode = #tpu.pipeline_mode<synchronous>, transform_indices = @transform_21, window_bounds = array<i64: 32, 96>}, {pipeline_mode = #tpu.pipeline_mode<synchronous>, transform_indices = @transform_22, window_bounds = array<i64: 1, 96>}, {pipeline_mode = #tpu.pipeline_mode<synchronous>, transform_indices = @transform_23, window_bounds = array<i64: 1, 96>}, {pipeline_mode = #tpu.pipeline_mode<synchronous>, transform_indices = @transform_24, window_bounds = array<i64: 32, 96>}, {pipeline_mode = #tpu.pipeline_mode<synchronous>, transform_indices = @transform_25, window_bounds = array<i64: 32, 96>}, {pipeline_mode = #tpu.pipeline_mode<synchronous>, transform_indices = @transform_26, window_bounds = array<i64: 1, 96>}, {pipeline_mode = #tpu.pipeline_mode<synchronous>, transform_indices = @transform_27, window_bounds = array<i64: 1, 96>}, {transform_indices = @transform_28, window_bounds = array<i64: 16, 32>}]} {
    %c0 = arith.constant 0 : index
    %c0_0 = arith.constant 0 : index
    %0 = vector.load %arg1[%c0, %c0_0] : memref<16x32xf32, #tpu.memory_space<vmem>>, vector<16x32xf32>
    %c0_1 = arith.constant 0 : index
    %c0_2 = arith.constant 0 : index
    %1 = vector.load %arg2[%c0_1, %c0_2] : memref<128x32xf32, #tpu.memory_space<vmem>>, vector<128x32xf32>
    %c0_3 = arith.constant 0 : index
    %c0_4 = arith.constant 0 : index
    %2 = vector.load %arg3[%c0_3, %c0_4] : memref<1x32xf32, #tpu.memory_space<vmem>>, vector<1x32xf32>
    %c0_5 = arith.constant 0 : index
    %c0_6 = arith.constant 0 : index
    %3 = vector.load %arg4[%c0_5, %c0_6] : memref<1x32xf32, #tpu.memory_space<vmem>>, vector<1x32xf32>
    %cst = arith.constant dense<0.000000e+00> : vector<16xf32>
    %4 = vector.multi_reduction <add>, %0, %cst [1] : vector<16x32xf32> to vector<16xf32>
    %5 = vector.shape_cast %4 : vector<16xf32> to vector<16x1xf32>
    %cst_7 = arith.constant 3.200000e+01 : f32
    %6 = vector.broadcast %cst_7 : f32 to vector<16x1xf32>
    %7 = arith.divf %5, %6 : vector<16x1xf32>
    %8 = vector.broadcast %7 : vector<16x1xf32> to vector<16x32xf32>
    %9 = arith.subf %0, %8 : vector<16x32xf32>
    %10 = arith.mulf %9, %9 : vector<16x32xf32>
    %cst_8 = arith.constant dense<0.000000e+00> : vector<16xf32>
    %11 = vector.multi_reduction <add>, %10, %cst_8 [1] : vector<16x32xf32> to vector<16xf32>
    %12 = vector.shape_cast %11 : vector<16xf32> to vector<16x1xf32>
    %cst_9 = arith.constant 3.200000e+01 : f32
    %13 = vector.broadcast %cst_9 : f32 to vector<16x1xf32>
    %14 = arith.divf %12, %13 : vector<16x1xf32>
    %15 = vector.broadcast %7 : vector<16x1xf32> to vector<16x32xf32>
    %16 = arith.subf %0, %15 : vector<16x32xf32>
    %cst_10 = arith.constant 9.99999974E-6 : f32
    %17 = vector.broadcast %cst_10 : f32 to vector<16x1xf32>
    %18 = arith.addf %14, %17 : vector<16x1xf32>
    %19 = math.rsqrt %18 : vector<16x1xf32>
    %20 = vector.broadcast %19 : vector<16x1xf32> to vector<16x32xf32>
    %21 = arith.mulf %16, %20 : vector<16x32xf32>
    %22 = vector.broadcast %2 : vector<1x32xf32> to vector<16x32xf32>
    %23 = arith.mulf %21, %22 : vector<16x32xf32>
    %24 = vector.broadcast %3 : vector<1x32xf32> to vector<16x32xf32>
    %25 = arith.addf %23, %24 : vector<16x32xf32>
    %c0_11 = arith.constant 0 : index
    %c0_12 = arith.constant 0 : index
    %26 = vector.load %arg7[%c0_11, %c0_12] : memref<32x32xbf16, #tpu.memory_space<vmem>>, vector<32x32xbf16>
    %27 = arith.truncf %25 : vector<16x32xf32> to vector<16x32xbf16>
    %cst_13 = arith.constant dense<0.000000e+00> : vector<16x32xf32>
    %28 = tpu.matmul %27, %26, %cst_13 {dimension_numbers = #tpu.dot_dimension_numbers<[1], [0], [0], [1], [0, 0, 1, 1], [], []>} : vector<16x32xbf16>, vector<32x32xbf16>, vector<16x32xf32> -> vector<16x32xf32>
    %c0_14 = arith.constant 0 : index
    %c0_15 = arith.constant 0 : index
    %29 = vector.load %arg8[%c0_14, %c0_15] : memref<1x32xf32, #tpu.memory_space<vmem>>, vector<1x32xf32>
    %30 = vector.broadcast %29 : vector<1x32xf32> to vector<16x32xf32>
    %31 = arith.addf %28, %30 : vector<16x32xf32>
    %c0_16 = arith.constant 0 : index
    %c0_17 = arith.constant 0 : index
    %32 = vector.load %arg5[%c0_16, %c0_17] : memref<1x32xf32, #tpu.memory_space<vmem>>, vector<1x32xf32>
    %c0_18 = arith.constant 0 : index
    %c0_19 = arith.constant 0 : index
    %33 = vector.load %arg6[%c0_18, %c0_19] : memref<1x32xf32, #tpu.memory_space<vmem>>, vector<1x32xf32>
    %cst_20 = arith.constant dense<0.000000e+00> : vector<128xf32>
    %34 = vector.multi_reduction <add>, %1, %cst_20 [1] : vector<128x32xf32> to vector<128xf32>
    %35 = vector.shape_cast %34 : vector<128xf32> to vector<128x1xf32>
    %cst_21 = arith.constant 3.200000e+01 : f32
    %36 = vector.broadcast %cst_21 : f32 to vector<128x1xf32>
    %37 = arith.divf %35, %36 : vector<128x1xf32>
    %38 = vector.broadcast %37 : vector<128x1xf32> to vector<128x32xf32>
    %39 = arith.subf %1, %38 : vector<128x32xf32>
    %40 = arith.mulf %39, %39 : vector<128x32xf32>
    %cst_22 = arith.constant dense<0.000000e+00> : vector<128xf32>
    %41 = vector.multi_reduction <add>, %40, %cst_22 [1] : vector<128x32xf32> to vector<128xf32>
    %42 = vector.shape_cast %41 : vector<128xf32> to vector<128x1xf32>
    %cst_23 = arith.constant 3.200000e+01 : f32
    %43 = vector.broadcast %cst_23 : f32 to vector<128x1xf32>
    %44 = arith.divf %42, %43 : vector<128x1xf32>
    %45 = vector.broadcast %37 : vector<128x1xf32> to vector<128x32xf32>
    %46 = arith.subf %1, %45 : vector<128x32xf32>
    %cst_24 = arith.constant 9.99999974E-6 : f32
    %47 = vector.broadcast %cst_24 : f32 to vector<128x1xf32>
    %48 = arith.addf %44, %47 : vector<128x1xf32>
    %49 = math.rsqrt %48 : vector<128x1xf32>
    %50 = vector.broadcast %49 : vector<128x1xf32> to vector<128x32xf32>
    %51 = arith.mulf %46, %50 : vector<128x32xf32>
    %52 = vector.broadcast %32 : vector<1x32xf32> to vector<128x32xf32>
    %53 = arith.mulf %51, %52 : vector<128x32xf32>
    %54 = vector.broadcast %33 : vector<1x32xf32> to vector<128x32xf32>
    %55 = arith.addf %53, %54 : vector<128x32xf32>
    %c0_25 = arith.constant 0 : index
    %c0_26 = arith.constant 0 : index
    %56 = vector.load %arg9[%c0_25, %c0_26] : memref<32x32xbf16, #tpu.memory_space<vmem>>, vector<32x32xbf16>
    %57 = arith.truncf %55 : vector<128x32xf32> to vector<128x32xbf16>
    %cst_27 = arith.constant dense<0.000000e+00> : vector<128x32xf32>
    %58 = tpu.matmul %57, %56, %cst_27 {dimension_numbers = #tpu.dot_dimension_numbers<[1], [0], [0], [1], [0, 0, 1, 1], [], []>} : vector<128x32xbf16>, vector<32x32xbf16>, vector<128x32xf32> -> vector<128x32xf32>
    %c0_28 = arith.constant 0 : index
    %c0_29 = arith.constant 0 : index
    %59 = vector.load %arg10[%c0_28, %c0_29] : memref<1x32xf32, #tpu.memory_space<vmem>>, vector<1x32xf32>
    %60 = vector.broadcast %59 : vector<1x32xf32> to vector<128x32xf32>
    %61 = arith.addf %58, %60 : vector<128x32xf32>
    %c0_30 = arith.constant 0 : index
    %c0_31 = arith.constant 0 : index
    %62 = vector.load %arg11[%c0_30, %c0_31] : memref<32x32xbf16, #tpu.memory_space<vmem>>, vector<32x32xbf16>
    %63 = arith.truncf %55 : vector<128x32xf32> to vector<128x32xbf16>
    %cst_32 = arith.constant dense<0.000000e+00> : vector<128x32xf32>
    %64 = tpu.matmul %63, %62, %cst_32 {dimension_numbers = #tpu.dot_dimension_numbers<[1], [0], [0], [1], [0, 0, 1, 1], [], []>} : vector<128x32xbf16>, vector<32x32xbf16>, vector<128x32xf32> -> vector<128x32xf32>
    %c0_33 = arith.constant 0 : index
    %c0_34 = arith.constant 0 : index
    %65 = vector.load %arg12[%c0_33, %c0_34] : memref<1x32xf32, #tpu.memory_space<vmem>>, vector<1x32xf32>
    %66 = vector.broadcast %65 : vector<1x32xf32> to vector<128x32xf32>
    %67 = arith.addf %64, %66 : vector<128x32xf32>
    %68 = vector.shape_cast %61 : vector<128x32xf32> to vector<16x8x32xf32>
    %69 = vector.shape_cast %67 : vector<128x32xf32> to vector<16x8x32xf32>
    %70 = vector.shape_cast %31 : vector<16x32xf32> to vector<16x1x32xf32>
    %71 = vector.broadcast %70 : vector<16x1x32xf32> to vector<16x8x32xf32>
    %72 = arith.mulf %71, %68 : vector<16x8x32xf32>
    %73 = vector.shape_cast %72 : vector<16x8x32xf32> to vector<128x32xf32>
    %c0_35 = arith.constant 0 : index
    %c0_36 = arith.constant 0 : index
    %74 = vector.load %arg13[%c0_35, %c0_36] : memref<32x4xf32, #tpu.memory_space<vmem>>, vector<32x4xf32>
    %cst_37 = arith.constant dense<0.000000e+00> : vector<128x4xf32>
    %75 = tpu.matmul %73, %74, %cst_37 {dimension_numbers = #tpu.dot_dimension_numbers<[1], [0], [0], [1], [0, 0, 1, 1], [], []>} : vector<128x32xf32>, vector<32x4xf32>, vector<128x4xf32> -> vector<128x4xf32>
    %76 = vector.shape_cast %75 : vector<128x4xf32> to vector<16x8x4xf32>
    %cst_38 = arith.constant dense<0xFF800000> : vector<16x4xf32>
    %77 = vector.multi_reduction <maximumf>, %76, %cst_38 [1] : vector<16x8x4xf32> to vector<16x4xf32>
    %78 = vector.shape_cast %77 : vector<16x4xf32> to vector<16x1x4xf32>
    %79 = vector.broadcast %78 : vector<16x1x4xf32> to vector<16x8x4xf32>
    %80 = arith.subf %76, %79 : vector<16x8x4xf32>
    %81 = math.exp %80 : vector<16x8x4xf32>
    %cst_39 = arith.constant dense<0.000000e+00> : vector<16x4xf32>
    %82 = vector.multi_reduction <add>, %81, %cst_39 [1] : vector<16x8x4xf32> to vector<16x4xf32>
    %83 = vector.shape_cast %82 : vector<16x4xf32> to vector<16x1x4xf32>
    %84 = tpu.reciprocal %83 {approx = true} : vector<16x1x4xf32> -> vector<16x1x4xf32>
    %85 = vector.broadcast %84 : vector<16x1x4xf32> to vector<16x8x4xf32>
    %86 = arith.mulf %81, %85 : vector<16x8x4xf32>
    %87 = vector.shape_cast %86 : vector<16x8x4xf32> to vector<128x4xf32>
    %c0_40 = arith.constant 0 : index
    %c0_41 = arith.constant 0 : index
    %88 = vector.load %arg14[%c0_40, %c0_41] : memref<4x32xf32, #tpu.memory_space<vmem>>, vector<4x32xf32>
    %cst_42 = arith.constant dense<0.000000e+00> : vector<128x32xf32>
    %89 = tpu.matmul %87, %88, %cst_42 {dimension_numbers = #tpu.dot_dimension_numbers<[1], [0], [0], [1], [0, 0, 1, 1], [], []>} : vector<128x4xf32>, vector<4x32xf32>, vector<128x32xf32> -> vector<128x32xf32>
    %90 = vector.shape_cast %89 : vector<128x32xf32> to vector<16x8x32xf32>
    %91 = arith.mulf %90, %69 : vector<16x8x32xf32>
    %cst_43 = arith.constant dense<0.000000e+00> : vector<16x32xf32>
    %92 = vector.multi_reduction <add>, %91, %cst_43 [1] : vector<16x8x32xf32> to vector<16x32xf32>
    %c0_44 = arith.constant 0 : index
    %c0_45 = arith.constant 0 : index
    %93 = vector.load %arg15[%c0_44, %c0_45] : memref<32x32xbf16, #tpu.memory_space<vmem>>, vector<32x32xbf16>
    %94 = arith.truncf %92 : vector<16x32xf32> to vector<16x32xbf16>
    %cst_46 = arith.constant dense<0.000000e+00> : vector<16x32xf32>
    %95 = tpu.matmul %94, %93, %cst_46 {dimension_numbers = #tpu.dot_dimension_numbers<[1], [0], [0], [1], [0, 0, 1, 1], [], []>} : vector<16x32xbf16>, vector<32x32xbf16>, vector<16x32xf32> -> vector<16x32xf32>
    %c0_47 = arith.constant 0 : index
    %c0_48 = arith.constant 0 : index
    %96 = vector.load %arg16[%c0_47, %c0_48] : memref<1x32xf32, #tpu.memory_space<vmem>>, vector<1x32xf32>
    %97 = vector.broadcast %96 : vector<1x32xf32> to vector<16x32xf32>
    %98 = arith.addf %95, %97 : vector<16x32xf32>
    %99 = arith.negf %98 : vector<16x32xf32>
    %100 = math.exp %99 : vector<16x32xf32>
    %cst_49 = arith.constant 1.000000e+00 : f32
    %101 = vector.broadcast %cst_49 : f32 to vector<16x32xf32>
    %102 = arith.addf %101, %100 : vector<16x32xf32>
    %103 = arith.divf %101, %102 : vector<16x32xf32>
    %104 = arith.mulf %98, %103 : vector<16x32xf32>
    %c0_50 = arith.constant 0 : index
    %c0_51 = arith.constant 0 : index
    %105 = vector.load %arg21[%c0_50, %c0_51] : memref<32x96xbf16, #tpu.memory_space<vmem>>, vector<32x96xbf16>
    %106 = arith.truncf %104 : vector<16x32xf32> to vector<16x32xbf16>
    %cst_52 = arith.constant dense<0.000000e+00> : vector<16x96xf32>
    %107 = tpu.matmul %106, %105, %cst_52 {dimension_numbers = #tpu.dot_dimension_numbers<[1], [0], [0], [1], [0, 0, 1, 1], [], []>} : vector<16x32xbf16>, vector<32x96xbf16>, vector<16x96xf32> -> vector<16x96xf32>
    %c0_53 = arith.constant 0 : index
    %c0_54 = arith.constant 0 : index
    %108 = vector.load %arg23[%c0_53, %c0_54] : memref<1x96xf32, #tpu.memory_space<vmem>>, vector<1x96xf32>
    %109 = vector.broadcast %108 : vector<1x96xf32> to vector<16x96xf32>
    %110 = arith.addf %107, %109 : vector<16x96xf32>
    %c0_55 = arith.constant 0 : index
    %c0_56 = arith.constant 0 : index
    %111 = vector.load %arg22[%c0_55, %c0_56] : memref<32x96xbf16, #tpu.memory_space<vmem>>, vector<32x96xbf16>
    %112 = arith.truncf %0 : vector<16x32xf32> to vector<16x32xbf16>
    %cst_57 = arith.constant dense<0.000000e+00> : vector<16x96xf32>
    %113 = tpu.matmul %112, %111, %cst_57 {dimension_numbers = #tpu.dot_dimension_numbers<[1], [0], [0], [1], [0, 0, 1, 1], [], []>} : vector<16x32xbf16>, vector<32x96xbf16>, vector<16x96xf32> -> vector<16x96xf32>
    %c0_58 = arith.constant 0 : index
    %c0_59 = arith.constant 0 : index
    %114 = vector.load %arg24[%c0_58, %c0_59] : memref<1x96xf32, #tpu.memory_space<vmem>>, vector<1x96xf32>
    %115 = vector.broadcast %114 : vector<1x96xf32> to vector<16x96xf32>
    %116 = arith.addf %113, %115 : vector<16x96xf32>
    %117 = vector.extract_strided_slice %110 {offsets = [0, 0], sizes = [16, 32], strides = [1, 1]} : vector<16x96xf32> to vector<16x32xf32>
    %118 = vector.extract_strided_slice %116 {offsets = [0, 0], sizes = [16, 32], strides = [1, 1]} : vector<16x96xf32> to vector<16x32xf32>
    %119 = arith.addf %117, %118 : vector<16x32xf32>
    %120 = arith.negf %119 : vector<16x32xf32>
    %121 = math.exp %120 : vector<16x32xf32>
    %cst_60 = arith.constant 1.000000e+00 : f32
    %122 = vector.broadcast %cst_60 : f32 to vector<16x32xf32>
    %123 = arith.addf %122, %121 : vector<16x32xf32>
    %124 = arith.divf %122, %123 : vector<16x32xf32>
    %125 = vector.extract_strided_slice %110 {offsets = [0, 32], sizes = [16, 32], strides = [1, 1]} : vector<16x96xf32> to vector<16x32xf32>
    %126 = vector.extract_strided_slice %116 {offsets = [0, 32], sizes = [16, 32], strides = [1, 1]} : vector<16x96xf32> to vector<16x32xf32>
    %127 = arith.addf %125, %126 : vector<16x32xf32>
    %128 = arith.negf %127 : vector<16x32xf32>
    %129 = math.exp %128 : vector<16x32xf32>
    %cst_61 = arith.constant 1.000000e+00 : f32
    %130 = vector.broadcast %cst_61 : f32 to vector<16x32xf32>
    %131 = arith.addf %130, %129 : vector<16x32xf32>
    %132 = arith.divf %130, %131 : vector<16x32xf32>
    %133 = vector.extract_strided_slice %110 {offsets = [0, 64], sizes = [16, 32], strides = [1, 1]} : vector<16x96xf32> to vector<16x32xf32>
    %134 = vector.extract_strided_slice %116 {offsets = [0, 64], sizes = [16, 32], strides = [1, 1]} : vector<16x96xf32> to vector<16x32xf32>
    %135 = arith.mulf %124, %134 : vector<16x32xf32>
    %136 = arith.addf %133, %135 : vector<16x32xf32>
    %137 = math.tanh %136 : vector<16x32xf32>
    %cst_62 = arith.constant 1.000000e+00 : f32
    %138 = vector.broadcast %cst_62 : f32 to vector<16x32xf32>
    %139 = arith.subf %138, %132 : vector<16x32xf32>
    %140 = arith.mulf %139, %137 : vector<16x32xf32>
    %141 = arith.mulf %132, %0 : vector<16x32xf32>
    %142 = arith.addf %140, %141 : vector<16x32xf32>
    %c0_63 = arith.constant 0 : index
    %c0_64 = arith.constant 0 : index
    %143 = vector.load %arg17[%c0_63, %c0_64] : memref<1x32xf32, #tpu.memory_space<vmem>>, vector<1x32xf32>
    %c0_65 = arith.constant 0 : index
    %c0_66 = arith.constant 0 : index
    %144 = vector.load %arg18[%c0_65, %c0_66] : memref<1x32xf32, #tpu.memory_space<vmem>>, vector<1x32xf32>
    %cst_67 = arith.constant dense<0.000000e+00> : vector<16xf32>
    %145 = vector.multi_reduction <add>, %142, %cst_67 [1] : vector<16x32xf32> to vector<16xf32>
    %146 = vector.shape_cast %145 : vector<16xf32> to vector<16x1xf32>
    %cst_68 = arith.constant 3.200000e+01 : f32
    %147 = vector.broadcast %cst_68 : f32 to vector<16x1xf32>
    %148 = arith.divf %146, %147 : vector<16x1xf32>
    %149 = vector.broadcast %148 : vector<16x1xf32> to vector<16x32xf32>
    %150 = arith.subf %142, %149 : vector<16x32xf32>
    %151 = arith.mulf %150, %150 : vector<16x32xf32>
    %cst_69 = arith.constant dense<0.000000e+00> : vector<16xf32>
    %152 = vector.multi_reduction <add>, %151, %cst_69 [1] : vector<16x32xf32> to vector<16xf32>
    %153 = vector.shape_cast %152 : vector<16xf32> to vector<16x1xf32>
    %cst_70 = arith.constant 3.200000e+01 : f32
    %154 = vector.broadcast %cst_70 : f32 to vector<16x1xf32>
    %155 = arith.divf %153, %154 : vector<16x1xf32>
    %156 = vector.broadcast %148 : vector<16x1xf32> to vector<16x32xf32>
    %157 = arith.subf %142, %156 : vector<16x32xf32>
    %cst_71 = arith.constant 9.99999974E-6 : f32
    %158 = vector.broadcast %cst_71 : f32 to vector<16x1xf32>
    %159 = arith.addf %155, %158 : vector<16x1xf32>
    %160 = math.rsqrt %159 : vector<16x1xf32>
    %161 = vector.broadcast %160 : vector<16x1xf32> to vector<16x32xf32>
    %162 = arith.mulf %157, %161 : vector<16x32xf32>
    %163 = vector.broadcast %143 : vector<1x32xf32> to vector<16x32xf32>
    %164 = arith.mulf %162, %163 : vector<16x32xf32>
    %165 = vector.broadcast %144 : vector<1x32xf32> to vector<16x32xf32>
    %166 = arith.addf %164, %165 : vector<16x32xf32>
    %c0_72 = arith.constant 0 : index
    %c0_73 = arith.constant 0 : index
    %167 = vector.load %arg19[%c0_72, %c0_73] : memref<32x32xbf16, #tpu.memory_space<vmem>>, vector<32x32xbf16>
    %168 = arith.truncf %166 : vector<16x32xf32> to vector<16x32xbf16>
    %cst_74 = arith.constant dense<0.000000e+00> : vector<16x32xf32>
    %169 = tpu.matmul %168, %167, %cst_74 {dimension_numbers = #tpu.dot_dimension_numbers<[1], [0], [0], [1], [0, 0, 1, 1], [], []>} : vector<16x32xbf16>, vector<32x32xbf16>, vector<16x32xf32> -> vector<16x32xf32>
    %c0_75 = arith.constant 0 : index
    %c0_76 = arith.constant 0 : index
    %170 = vector.load %arg20[%c0_75, %c0_76] : memref<1x32xf32, #tpu.memory_space<vmem>>, vector<1x32xf32>
    %171 = vector.broadcast %170 : vector<1x32xf32> to vector<16x32xf32>
    %172 = arith.addf %169, %171 : vector<16x32xf32>
    %173 = arith.negf %172 : vector<16x32xf32>
    %174 = math.exp %173 : vector<16x32xf32>
    %cst_77 = arith.constant 1.000000e+00 : f32
    %175 = vector.broadcast %cst_77 : f32 to vector<16x32xf32>
    %176 = arith.addf %175, %174 : vector<16x32xf32>
    %177 = arith.divf %175, %176 : vector<16x32xf32>
    %178 = arith.mulf %172, %177 : vector<16x32xf32>
    %c0_78 = arith.constant 0 : index
    %c0_79 = arith.constant 0 : index
    %179 = vector.load %arg25[%c0_78, %c0_79] : memref<32x96xbf16, #tpu.memory_space<vmem>>, vector<32x96xbf16>
    %180 = arith.truncf %178 : vector<16x32xf32> to vector<16x32xbf16>
    %cst_80 = arith.constant dense<0.000000e+00> : vector<16x96xf32>
    %181 = tpu.matmul %180, %179, %cst_80 {dimension_numbers = #tpu.dot_dimension_numbers<[1], [0], [0], [1], [0, 0, 1, 1], [], []>} : vector<16x32xbf16>, vector<32x96xbf16>, vector<16x96xf32> -> vector<16x96xf32>
    %c0_81 = arith.constant 0 : index
    %c0_82 = arith.constant 0 : index
    %182 = vector.load %arg27[%c0_81, %c0_82] : memref<1x96xf32, #tpu.memory_space<vmem>>, vector<1x96xf32>
    %183 = vector.broadcast %182 : vector<1x96xf32> to vector<16x96xf32>
    %184 = arith.addf %181, %183 : vector<16x96xf32>
    %c0_83 = arith.constant 0 : index
    %c0_84 = arith.constant 0 : index
    %185 = vector.load %arg26[%c0_83, %c0_84] : memref<32x96xbf16, #tpu.memory_space<vmem>>, vector<32x96xbf16>
    %186 = arith.truncf %142 : vector<16x32xf32> to vector<16x32xbf16>
    %cst_85 = arith.constant dense<0.000000e+00> : vector<16x96xf32>
    %187 = tpu.matmul %186, %185, %cst_85 {dimension_numbers = #tpu.dot_dimension_numbers<[1], [0], [0], [1], [0, 0, 1, 1], [], []>} : vector<16x32xbf16>, vector<32x96xbf16>, vector<16x96xf32> -> vector<16x96xf32>
    %c0_86 = arith.constant 0 : index
    %c0_87 = arith.constant 0 : index
    %188 = vector.load %arg28[%c0_86, %c0_87] : memref<1x96xf32, #tpu.memory_space<vmem>>, vector<1x96xf32>
    %189 = vector.broadcast %188 : vector<1x96xf32> to vector<16x96xf32>
    %190 = arith.addf %187, %189 : vector<16x96xf32>
    %191 = vector.extract_strided_slice %184 {offsets = [0, 0], sizes = [16, 32], strides = [1, 1]} : vector<16x96xf32> to vector<16x32xf32>
    %192 = vector.extract_strided_slice %190 {offsets = [0, 0], sizes = [16, 32], strides = [1, 1]} : vector<16x96xf32> to vector<16x32xf32>
    %193 = arith.addf %191, %192 : vector<16x32xf32>
    %194 = arith.negf %193 : vector<16x32xf32>
    %195 = math.exp %194 : vector<16x32xf32>
    %cst_88 = arith.constant 1.000000e+00 : f32
    %196 = vector.broadcast %cst_88 : f32 to vector<16x32xf32>
    %197 = arith.addf %196, %195 : vector<16x32xf32>
    %198 = arith.divf %196, %197 : vector<16x32xf32>
    %199 = vector.extract_strided_slice %184 {offsets = [0, 32], sizes = [16, 32], strides = [1, 1]} : vector<16x96xf32> to vector<16x32xf32>
    %200 = vector.extract_strided_slice %190 {offsets = [0, 32], sizes = [16, 32], strides = [1, 1]} : vector<16x96xf32> to vector<16x32xf32>
    %201 = arith.addf %199, %200 : vector<16x32xf32>
    %202 = arith.negf %201 : vector<16x32xf32>
    %203 = math.exp %202 : vector<16x32xf32>
    %cst_89 = arith.constant 1.000000e+00 : f32
    %204 = vector.broadcast %cst_89 : f32 to vector<16x32xf32>
    %205 = arith.addf %204, %203 : vector<16x32xf32>
    %206 = arith.divf %204, %205 : vector<16x32xf32>
    %207 = vector.extract_strided_slice %184 {offsets = [0, 64], sizes = [16, 32], strides = [1, 1]} : vector<16x96xf32> to vector<16x32xf32>
    %208 = vector.extract_strided_slice %190 {offsets = [0, 64], sizes = [16, 32], strides = [1, 1]} : vector<16x96xf32> to vector<16x32xf32>
    %209 = arith.mulf %198, %208 : vector<16x32xf32>
    %210 = arith.addf %207, %209 : vector<16x32xf32>
    %211 = math.tanh %210 : vector<16x32xf32>
    %cst_90 = arith.constant 1.000000e+00 : f32
    %212 = vector.broadcast %cst_90 : f32 to vector<16x32xf32>
    %213 = arith.subf %212, %206 : vector<16x32xf32>
    %214 = arith.mulf %213, %211 : vector<16x32xf32>
    %215 = arith.mulf %206, %142 : vector<16x32xf32>
    %216 = arith.addf %214, %215 : vector<16x32xf32>
    %c0_91 = arith.constant 0 : index
    %c0_92 = arith.constant 0 : index
    %217 = vector.load %arg29[%c0_91, %c0_92] : memref<16x32xf32, #tpu.memory_space<vmem>>, vector<16x32xf32>
    tpu.vector_store %arg29[%c0_91, %c0_92], %216 {strides = array<i32>} : memref<16x32xf32, #tpu.memory_space<vmem>>, vector<16x32xf32>,
    return
  }
  func.func @transform_0(%arg0: i32) -> (i32, i32) {
    %c0_i32 = arith.constant 0 : i32
    %c0_i32_0 = arith.constant 0 : i32
    return %arg0, %c0_i32 : i32, i32
  }
  func.func @transform_1(%arg0: i32) -> (i32, i32) {
    %c0_i32 = arith.constant 0 : i32
    %c0_i32_0 = arith.constant 0 : i32
    return %arg0, %c0_i32 : i32, i32
  }
  func.func @transform_2(%arg0: i32) -> (i32, i32) {
    %c0_i32 = arith.constant 0 : i32
    %c0_i32_0 = arith.constant 0 : i32
    %c0_i32_1 = arith.constant 0 : i32
    return %c0_i32, %c0_i32_0 : i32, i32
  }
  func.func @transform_3(%arg0: i32) -> (i32, i32) {
    %c0_i32 = arith.constant 0 : i32
    %c0_i32_0 = arith.constant 0 : i32
    %c0_i32_1 = arith.constant 0 : i32
    return %c0_i32, %c0_i32_0 : i32, i32
  }
  func.func @transform_4(%arg0: i32) -> (i32, i32) {
    %c0_i32 = arith.constant 0 : i32
    %c0_i32_0 = arith.constant 0 : i32
    %c0_i32_1 = arith.constant 0 : i32
    return %c0_i32, %c0_i32_0 : i32, i32
  }
  func.func @transform_5(%arg0: i32) -> (i32, i32) {
    %c0_i32 = arith.constant 0 : i32
    %c0_i32_0 = arith.constant 0 : i32
    %c0_i32_1 = arith.constant 0 : i32
    return %c0_i32, %c0_i32_0 : i32, i32
  }
  func.func @transform_6(%arg0: i32) -> (i32, i32) {
    %c0_i32 = arith.constant 0 : i32
    %c0_i32_0 = arith.constant 0 : i32
    %c0_i32_1 = arith.constant 0 : i32
    return %c0_i32, %c0_i32_0 : i32, i32
  }
  func.func @transform_7(%arg0: i32) -> (i32, i32) {
    %c0_i32 = arith.constant 0 : i32
    %c0_i32_0 = arith.constant 0 : i32
    %c0_i32_1 = arith.constant 0 : i32
    return %c0_i32, %c0_i32_0 : i32, i32
  }
  func.func @transform_8(%arg0: i32) -> (i32, i32) {
    %c0_i32 = arith.constant 0 : i32
    %c0_i32_0 = arith.constant 0 : i32
    %c0_i32_1 = arith.constant 0 : i32
    return %c0_i32, %c0_i32_0 : i32, i32
  }
  func.func @transform_9(%arg0: i32) -> (i32, i32) {
    %c0_i32 = arith.constant 0 : i32
    %c0_i32_0 = arith.constant 0 : i32
    %c0_i32_1 = arith.constant 0 : i32
    return %c0_i32, %c0_i32_0 : i32, i32
  }
  func.func @transform_10(%arg0: i32) -> (i32, i32) {
    %c0_i32 = arith.constant 0 : i32
    %c0_i32_0 = arith.constant 0 : i32
    %c0_i32_1 = arith.constant 0 : i32
    return %c0_i32, %c0_i32_0 : i32, i32
  }
  func.func @transform_11(%arg0: i32) -> (i32, i32) {
    %c0_i32 = arith.constant 0 : i32
    %c0_i32_0 = arith.constant 0 : i32
    %c0_i32_1 = arith.constant 0 : i32
    return %c0_i32, %c0_i32_0 : i32, i32
  }
  func.func @transform_12(%arg0: i32) -> (i32, i32) {
    %c0_i32 = arith.constant 0 : i32
    %c0_i32_0 = arith.constant 0 : i32
    %c0_i32_1 = arith.constant 0 : i32
    return %c0_i32, %c0_i32_0 : i32, i32
  }
  func.func @transform_13(%arg0: i32) -> (i32, i32) {
    %c0_i32 = arith.constant 0 : i32
    %c0_i32_0 = arith.constant 0 : i32
    %c0_i32_1 = arith.constant 0 : i32
    return %c0_i32, %c0_i32_0 : i32, i32
  }
  func.func @transform_14(%arg0: i32) -> (i32, i32) {
    %c0_i32 = arith.constant 0 : i32
    %c0_i32_0 = arith.constant 0 : i32
    %c0_i32_1 = arith.constant 0 : i32
    return %c0_i32, %c0_i32_0 : i32, i32
  }
  func.func @transform_15(%arg0: i32) -> (i32, i32) {
    %c0_i32 = arith.constant 0 : i32
    %c0_i32_0 = arith.constant 0 : i32
    %c0_i32_1 = arith.constant 0 : i32
    return %c0_i32, %c0_i32_0 : i32, i32
  }
  func.func @transform_16(%arg0: i32) -> (i32, i32) {
    %c0_i32 = arith.constant 0 : i32
    %c0_i32_0 = arith.constant 0 : i32
    %c0_i32_1 = arith.constant 0 : i32
    return %c0_i32, %c0_i32_0 : i32, i32
  }
  func.func @transform_17(%arg0: i32) -> (i32, i32) {
    %c0_i32 = arith.constant 0 : i32
    %c0_i32_0 = arith.constant 0 : i32
    %c0_i32_1 = arith.constant 0 : i32
    return %c0_i32, %c0_i32_0 : i32, i32
  }
  func.func @transform_18(%arg0: i32) -> (i32, i32) {
    %c0_i32 = arith.constant 0 : i32
    %c0_i32_0 = arith.constant 0 : i32
    %c0_i32_1 = arith.constant 0 : i32
    return %c0_i32, %c0_i32_0 : i32, i32
  }
  func.func @transform_19(%arg0: i32) -> (i32, i32) {
    %c0_i32 = arith.constant 0 : i32
    %c0_i32_0 = arith.constant 0 : i32
    %c0_i32_1 = arith.constant 0 : i32
    return %c0_i32, %c0_i32_0 : i32, i32
  }
  func.func @transform_20(%arg0: i32) -> (i32, i32) {
    %c0_i32 = arith.constant 0 : i32
    %c0_i32_0 = arith.constant 0 : i32
    %c0_i32_1 = arith.constant 0 : i32
    return %c0_i32, %c0_i32_0 : i32, i32
  }
  func.func @transform_21(%arg0: i32) -> (i32, i32) {
    %c0_i32 = arith.constant 0 : i32
    %c0_i32_0 = arith.constant 0 : i32
    %c0_i32_1 = arith.constant 0 : i32
    return %c0_i32, %c0_i32_0 : i32, i32
  }
  func.func @transform_22(%arg0: i32) -> (i32, i32) {
    %c0_i32 = arith.constant 0 : i32
    %c0_i32_0 = arith.constant 0 : i32
    %c0_i32_1 = arith.constant 0 : i32
    return %c0_i32, %c0_i32_0 : i32, i32
  }
  func.func @transform_23(%arg0: i32) -> (i32, i32) {
    %c0_i32 = arith.constant 0 : i32
    %c0_i32_0 = arith.constant 0 : i32
    %c0_i32_1 = arith.constant 0 : i32
    return %c0_i32, %c0_i32_0 : i32, i32
  }
  func.func @transform_24(%arg0: i32) -> (i32, i32) {
    %c0_i32 = arith.constant 0 : i32
    %c0_i32_0 = arith.constant 0 : i32
    %c0_i32_1 = arith.constant 0 : i32
    return %c0_i32, %c0_i32_0 : i32, i32
  }
  func.func @transform_25(%arg0: i32) -> (i32, i32) {
    %c0_i32 = arith.constant 0 : i32
    %c0_i32_0 = arith.constant 0 : i32
    %c0_i32_1 = arith.constant 0 : i32
    return %c0_i32, %c0_i32_0 : i32, i32
  }
  func.func @transform_26(%arg0: i32) -> (i32, i32) {
    %c0_i32 = arith.constant 0 : i32
    %c0_i32_0 = arith.constant 0 : i32
    %c0_i32_1 = arith.constant 0 : i32
    return %c0_i32, %c0_i32_0 : i32, i32
  }
  func.func @transform_27(%arg0: i32) -> (i32, i32) {
    %c0_i32 = arith.constant 0 : i32
    %c0_i32_0 = arith.constant 0 : i32
    %c0_i32_1 = arith.constant 0 : i32
    return %c0_i32, %c0_i32_0 : i32, i32
  }
  func.func @transform_28(%arg0: i32) -> (i32, i32) {
    %c0_i32 = arith.constant 0 : i32
    %c0_i32_0 = arith.constant 0 : i32
    return %arg0, %c0_i32 : i32, i32
  }
}

</mosaic_0001>

<llo_original>
// kernel: tpu_custom_call.1
$region0: #{tpu_custom_call.1}
  #allocation0 [shape = 'u32[]', space=smem, size = 0x4, offset = 0x4, fixed_abs, tag = 'smem constant byte address 0x4 - core index']
  #allocation1 [shape = 'u32[72,128]{1,0:T(1,128)}', space=vmem, size = 0x9000, scoped, tag = 'internal scratch']
  %s0 = inlined_call_operand.vmem [shape: f32[16,32], index: 0, kind: input, shape index: {}]
  %s1 = inlined_call_operand.vmem [shape: f32[128,32], index: 1, kind: input, shape index: {}]
  %s2 = inlined_call_operand.hbm [shape: f32[1,32], index: 2, kind: input, shape index: {}]
  %s3 = inlined_call_operand.vmem [shape: f32[1,32], index: 3, kind: input, shape index: {}]
  %s4 = inlined_call_operand.vmem [shape: f32[1,32], index: 4, kind: input, shape index: {}]
  %s5 = inlined_call_operand.hbm [shape: f32[1,32], index: 5, kind: input, shape index: {}]
  %s6 = inlined_call_operand.vmem [shape: bf16[32,32], index: 6, kind: input, shape index: {}]
  %s7 = inlined_call_operand.vmem [shape: f32[1,32], index: 7, kind: input, shape index: {}]
  %s8 = inlined_call_operand.vmem [shape: bf16[32,32], index: 8, kind: input, shape index: {}]
  %s9 = inlined_call_operand.vmem [shape: f32[1,32], index: 9, kind: input, shape index: {}]
  %s10 = inlined_call_operand.vmem [shape: bf16[32,32], index: 10, kind: input, shape index: {}]
  %s11 = inlined_call_operand.hbm [shape: f32[1,32], index: 11, kind: input, shape index: {}]
  %s12 = inlined_call_operand.vmem [shape: f32[32,4], index: 12, kind: input, shape index: {}]
  %s13 = inlined_call_operand.vmem [shape: f32[4,32], index: 13, kind: input, shape index: {}]
  %s14 = inlined_call_operand.vmem [shape: bf16[32,32], index: 14, kind: input, shape index: {}]
  %s15 = inlined_call_operand.vmem [shape: f32[1,32], index: 15, kind: input, shape index: {}]
  %s16 = inlined_call_operand.vmem [shape: f32[1,32], index: 16, kind: input, shape index: {}]
  %s17 = inlined_call_operand.vmem [shape: f32[1,32], index: 17, kind: input, shape index: {}]
  %s18 = inlined_call_operand.vmem [shape: bf16[32,32], index: 18, kind: input, shape index: {}]
  %s19 = inlined_call_operand.vmem [shape: f32[1,32], index: 19, kind: input, shape index: {}]
  %s20 = inlined_call_operand.vmem [shape: bf16[32,96], index: 20, kind: input, shape index: {}]
  %s21 = inlined_call_operand.vmem [shape: bf16[32,96], index: 21, kind: input, shape index: {}]
  %s22 = inlined_call_operand.vmem [shape: f32[1,96], index: 22, kind: input, shape index: {}]
  %s23 = inlined_call_operand.vmem [shape: f32[1,96], index: 23, kind: input, shape index: {}]
  %s24 = inlined_call_operand.vmem [shape: bf16[32,96], index: 24, kind: input, shape index: {}]
  %s25 = inlined_call_operand.vmem [shape: bf16[32,96], index: 25, kind: input, shape index: {}]
  %s26 = inlined_call_operand.vmem [shape: f32[1,96], index: 26, kind: input, shape index: {}]
  %s27 = inlined_call_operand.vmem [shape: f32[1,96], index: 27, kind: input, shape index: {}]
  %s28 = inlined_call_operand.hbm [shape: f32[16,32], index: 28, kind: output, shape index: {}]
  %s29 = sld [smem:[#allocation0]]
  $region134: #{tpu_custom_call.1} parent=0
    _
  %s31 = ssub.s32 1, %s29
  %s32 = scalar_select 0, %s31, %s29
  $region1: #{tpu_custom_call.1} parent=0
    #allocation2 [shape = 'u8[512]{0}', space=vmem, size = 0x400, scoped, tag = 'input window, operand 2, single buffered']
    #allocation3 [shape = 's32[1]{0}', space=sflag, size = 0x4, scoped, tag = 'scoped memory for tpu_custom_call.1']
    #allocation4 [shape = 's32[1]{0}', space=sflag, size = 0x4, scoped, tag = 'scoped memory for tpu_custom_call.1']
    #allocation5 [shape = 'u8[512]{0}', space=vmem, size = 0x400, scoped, tag = 'input window, operand 5, single buffered']
    #allocation6 [shape = 's32[1]{0}', space=sflag, size = 0x4, scoped, tag = 'scoped memory for tpu_custom_call.1']
    #allocation7 [shape = 'u8[512]{0}', space=vmem, size = 0x400, scoped, tag = 'input window, operand 11, single buffered']
    #allocation8 [shape = 'u8[8192]{0}', space=vmem, size = 0x2000, scoped, tag = 'output window, operand 0, single buffered']
    %33 = vsyncpa [#allocation3], 0
    %34 = vsyncpa [#allocation6], 0
    %35 = vsyncpa [#allocation4], 0
    // Predicated region
    $region2: #{tpu_custom_call.1} parent=1 // pred_check
      _
    $region3: #{tpu_custom_call.1} parent=1 // pred_check_branch
      %37 = sbr.rel (0) target = $region5
    $region4: #{tpu_custom_call.1} parent=1 // pred_region
      _
    $region5: #{tpu_custom_call.1} parent=1 // pred_fallthru
      _
    // Predicated region
    $region6: #{tpu_custom_call.1} parent=1 // pred_check
      _
    $region7: #{tpu_custom_call.1} parent=1 // pred_check_branch
      %39 = sbr.rel (0) target = $region9
    $region8: #{tpu_custom_call.1} parent=1 // pred_region
      _
    $region9: #{tpu_custom_call.1} parent=1 // pred_fallthru
      _
    // Predicated region
    $region10: #{tpu_custom_call.1} parent=1 // pred_check
      _
    $region11: #{tpu_custom_call.1} parent=1 // pred_check_branch
      %41 = sbr.rel (0) target = $region13
    $region12: #{tpu_custom_call.1} parent=1 // pred_region
      %43 = vsyncadd [#allocation3], 0
      %s45 = sshll.u32 %s2, 4
      %s46 = int_to_ptr.hbm [resolvable:$true] %s45
      %s47 = sshll.u32 [#allocation2], 4
      %s48 = int_to_ptr.vmem [resolvable:$true] %s47
      %50 = dma.hbm_to_vmem [thread:$0]  %s46, 16, %s48, [#allocation3]
    $region13: #{tpu_custom_call.1} parent=1 // pred_fallthru
      _
    // Predicated region
    $region14: #{tpu_custom_call.1} parent=1 // pred_check
      _
    $region15: #{tpu_custom_call.1} parent=1 // pred_check_branch
      %52 = sbr.rel (0) target = $region17
    $region16: #{tpu_custom_call.1} parent=1 // pred_region
      _
    $region17: #{tpu_custom_call.1} parent=1 // pred_fallthru
      _
    // Predicated region
    $region18: #{tpu_custom_call.1} parent=1 // pred_check
      _
    $region19: #{tpu_custom_call.1} parent=1 // pred_check_branch
      %54 = sbr.rel (0) target = $region21
    $region20: #{tpu_custom_call.1} parent=1 // pred_region
      _
    $region21: #{tpu_custom_call.1} parent=1 // pred_fallthru
      _
    // Predicated region
    $region22: #{tpu_custom_call.1} parent=1 // pred_check
      _
    $region23: #{tpu_custom_call.1} parent=1 // pred_check_branch
      %56 = sbr.rel (0) target = $region25
    $region24: #{tpu_custom_call.1} parent=1 // pred_region
      %58 = vsyncadd [#allocation6], 0
      %s60 = sshll.u32 %s5, 4
      %s61 = int_to_ptr.hbm [resolvable:$true] %s60
      %s62 = sshll.u32 [#allocation5], 4
      %s63 = int_to_ptr.vmem [resolvable:$true] %s62
      %65 = dma.hbm_to_vmem [thread:$0]  %s61, 16, %s63, [#allocation6]
    $region25: #{tpu_custom_call.1} parent=1 // pred_fallthru
      _
    // Predicated region
    $region26: #{tpu_custom_call.1} parent=1 // pred_check
      _
    $region27: #{tpu_custom_call.1} parent=1 // pred_check_branch
      %67 = sbr.rel (0) target = $region29
    $region28: #{tpu_custom_call.1} parent=1 // pred_region
      _
    $region29: #{tpu_custom_call.1} parent=1 // pred_fallthru
      _
    // Predicated region
    $region30: #{tpu_custom_call.1} parent=1 // pred_check
      _
    $region31: #{tpu_custom_call.1} parent=1 // pred_check_branch
      %69 = sbr.rel (0) target = $region33
    $region32: #{tpu_custom_call.1} parent=1 // pred_region
      _
    $region33: #{tpu_custom_call.1} parent=1 // pred_fallthru
      _
    // Predicated region
    $region34: #{tpu_custom_call.1} parent=1 // pred_check
      _
    $region35: #{tpu_custom_call.1} parent=1 // pred_check_branch
      %71 = sbr.rel (0) target = $region37
    $region36: #{tpu_custom_call.1} parent=1 // pred_region
      _
    $region37: #{tpu_custom_call.1} parent=1 // pred_fallthru
      _
    // Predicated region
    $region38: #{tpu_custom_call.1} parent=1 // pred_check
      _
    $region39: #{tpu_custom_call.1} parent=1 // pred_check_branch
      %73 = sbr.rel (0) target = $region41
    $region40: #{tpu_custom_call.1} parent=1 // pred_region
      _
    $region41: #{tpu_custom_call.1} parent=1 // pred_fallthru
      _
    // Predicated region
    $region42: #{tpu_custom_call.1} parent=1 // pred_check
      _
    $region43: #{tpu_custom_call.1} parent=1 // pred_check_branch
      %75 = sbr.rel (0) target = $region45
    $region44: #{tpu_custom_call.1} parent=1 // pred_region
      _
    $region45: #{tpu_custom_call.1} parent=1 // pred_fallthru
      _
    // Predicated region
    $region46: #{tpu_custom_call.1} parent=1 // pred_check
      _
    $region47: #{tpu_custom_call.1} parent=1 // pred_check_branch
      %77 = sbr.rel (0) target = $region49
    $region48: #{tpu_custom_call.1} parent=1 // pred_region
      %79 = vsyncadd [#allocation6], 0
      %s81 = sshll.u32 %s11, 4
      %s82 = int_to_ptr.hbm [resolvable:$true] %s81
      %s83 = sshll.u32 [#allocation7], 4
      %s84 = int_to_ptr.vmem [resolvable:$true] %s83
      %86 = dma.hbm_to_vmem [thread:$0]  %s82, 16, %s84, [#allocation6]
    $region49: #{tpu_custom_call.1} parent=1 // pred_fallthru
      _
    // Predicated region
    $region50: #{tpu_custom_call.1} parent=1 // pred_check
      _
    $region51: #{tpu_custom_call.1} parent=1 // pred_check_branch
      %88 = sbr.rel (0) target = $region53
    $region52: #{tpu_custom_call.1} parent=1 // pred_region
      _
    $region53: #{tpu_custom_call.1} parent=1 // pred_fallthru
      _
    // Predicated region
    $region54: #{tpu_custom_call.1} parent=1 // pred_check
      _
    $region55: #{tpu_custom_call.1} parent=1 // pred_check_branch
      %90 = sbr.rel (0) target = $region57
    $region56: #{tpu_custom_call.1} parent=1 // pred_region
      _
    $region57: #{tpu_custom_call.1} parent=1 // pred_fallthru
      _
    // Predicated region
    $region58: #{tpu_custom_call.1} parent=1 // pred_check
      _
    $region59: #{tpu_custom_call.1} parent=1 // pred_check_branch
      %92 = sbr.rel (0) target = $region61
    $region60: #{tpu_custom_call.1} parent=1 // pred_region
      _
    $region61: #{tpu_custom_call.1} parent=1 // pred_fallthru
      _
    // Predicated region
    $region62: #{tpu_custom_call.1} parent=1 // pred_check
      _
    $region63: #{tpu_custom_call.1} parent=1 // pred_check_branch
      %94 = sbr.rel (0) target = $region65
    $region64: #{tpu_custom_call.1} parent=1 // pred_region
      _
    $region65: #{tpu_custom_call.1} parent=1 // pred_fallthru
      _
    // Predicated region
    $region66: #{tpu_custom_call.1} parent=1 // pred_check
      _
    $region67: #{tpu_custom_call.1} parent=1 // pred_check_branch
      %96 = sbr.rel (0) target = $region69
    $region68: #{tpu_custom_call.1} parent=1 // pred_region
      _
    $region69: #{tpu_custom_call.1} parent=1 // pred_fallthru
      _
    // Predicated region
    $region70: #{tpu_custom_call.1} parent=1 // pred_check
      _
    $region71: #{tpu_custom_call.1} parent=1 // pred_check_branch
      %98 = sbr.rel (0) target = $region73
    $region72: #{tpu_custom_call.1} parent=1 // pred_region
      _
    $region73: #{tpu_custom_call.1} parent=1 // pred_fallthru
      _
    // Predicated region
    $region74: #{tpu_custom_call.1} parent=1 // pred_check
      _
    $region75: #{tpu_custom_call.1} parent=1 // pred_check_branch
      %100 = sbr.rel (0) target = $region77
    $region76: #{tpu_custom_call.1} parent=1 // pred_region
      _
    $region77: #{tpu_custom_call.1} parent=1 // pred_fallthru
      _
    // Predicated region
    $region78: #{tpu_custom_call.1} parent=1 // pred_check
      _
    $region79: #{tpu_custom_call.1} parent=1 // pred_check_branch
      %102 = sbr.rel (0) target = $region81
    $region80: #{tpu_custom_call.1} parent=1 // pred_region
      _
    $region81: #{tpu_custom_call.1} parent=1 // pred_fallthru
      _
    // Predicated region
    $region82: #{tpu_custom_call.1} parent=1 // pred_check
      _
    $region83: #{tpu_custom_call.1} parent=1 // pred_check_branch
      %104 = sbr.rel (0) target = $region85
    $region84: #{tpu_custom_call.1} parent=1 // pred_region
      _
    $region85: #{tpu_custom_call.1} parent=1 // pred_fallthru
      _
    // Predicated region
    $region86: #{tpu_custom_call.1} parent=1 // pred_check
      _
    $region87: #{tpu_custom_call.1} parent=1 // pred_check_branch
      %106 = sbr.rel (0) target = $region89
    $region88: #{tpu_custom_call.1} parent=1 // pred_region
      _
    $region89: #{tpu_custom_call.1} parent=1 // pred_fallthru
      _
    // Predicated region
    $region90: #{tpu_custom_call.1} parent=1 // pred_check
      _
    $region91: #{tpu_custom_call.1} parent=1 // pred_check_branch
      %108 = sbr.rel (0) target = $region93
    $region92: #{tpu_custom_call.1} parent=1 // pred_region
      _
    $region93: #{tpu_custom_call.1} parent=1 // pred_fallthru
      _
    // Predicated region
    $region94: #{tpu_custom_call.1} parent=1 // pred_check
      _
    $region95: #{tpu_custom_call.1} parent=1 // pred_check_branch
      %110 = sbr.rel (0) target = $region97
    $region96: #{tpu_custom_call.1} parent=1 // pred_region
      _
    $region97: #{tpu_custom_call.1} parent=1 // pred_fallthru
      _
    // Predicated region
    $region98: #{tpu_custom_call.1} parent=1 // pred_check
      _
    $region99: #{tpu_custom_call.1} parent=1 // pred_check_branch
      %112 = sbr.rel (0) target = $region101
    $region100: #{tpu_custom_call.1} parent=1 // pred_region
      _
    $region101: #{tpu_custom_call.1} parent=1 // pred_fallthru
      _
    // Predicated region
    $region102: #{tpu_custom_call.1} parent=1 // pred_check
      _
    $region103: #{tpu_custom_call.1} parent=1 // pred_check_branch
      %114 = sbr.rel (0) target = $region105
    $region104: #{tpu_custom_call.1} parent=1 // pred_region
      _
    $region105: #{tpu_custom_call.1} parent=1 // pred_fallthru
      _
    // Predicated region
    $region106: #{tpu_custom_call.1} parent=1 // pred_check
      _
    $region107: #{tpu_custom_call.1} parent=1 // pred_check_branch
      %116 = sbr.rel (0) target = $region109
    $region108: #{tpu_custom_call.1} parent=1 // pred_region
      _
    $region109: #{tpu_custom_call.1} parent=1 // pred_fallthru
      _
    // Predicated region
    $region110: #{tpu_custom_call.1} parent=1 // pred_check
      _
    $region111: #{tpu_custom_call.1} parent=1 // pred_check_branch
      %118 = sbr.rel (0) target = $region113
    $region112: #{tpu_custom_call.1} parent=1 // pred_region
      _
    $region113: #{tpu_custom_call.1} parent=1 // pred_fallthru
      _
    // Predicated region
    $region114: #{tpu_custom_call.1} parent=1 // pred_check
      _
    $region115: #{tpu_custom_call.1} parent=1 // pred_check_branch
      %120 = sbr.rel (0) target = $region117
    $region116: #{tpu_custom_call.1} parent=1 // pred_region
      %122 = dma.done [#allocation3], 16
    $region117: #{tpu_custom_call.1} parent=1 // pred_fallthru
      _
    // Predicated region
    $region118: #{tpu_custom_call.1} parent=1 // pred_check
      _
    $region119: #{tpu_custom_call.1} parent=1 // pred_check_branch
      %124 = sbr.rel (0) target = $region121
    $region120: #{tpu_custom_call.1} parent=1 // pred_region
      %126 = dma.done [#allocation6], 16
    $region121: #{tpu_custom_call.1} parent=1 // pred_fallthru
      _
    // Predicated region
    $region122: #{tpu_custom_call.1} parent=1 // pred_check
      _
    $region123: #{tpu_custom_call.1} parent=1 // pred_check_branch
      %128 = sbr.rel (0) target = $region125
    $region124: #{tpu_custom_call.1} parent=1 // pred_region
      %130 = dma.done [#allocation6], 16
    $region125: #{tpu_custom_call.1} parent=1 // pred_fallthru
      _
    %v132 = vld [vmem:[%s0] sm:$0xff]
    %v133 = vld [vmem:[%s0 + $0x8] sm:$0xff]
    %v134 = vld [vmem:[%s1] sm:$0xff]
    %v135 = vld [vmem:[%s1 + $0x8] sm:$0xff]
    %v136 = vld [vmem:[%s1 + $0x10] sm:$0xff]
    %v137 = vld [vmem:[%s1 + $0x18] sm:$0xff]
    %v138 = vld [vmem:[%s1 + $0x20] sm:$0xff]
    %v139 = vld [vmem:[%s1 + $0x28] sm:$0xff]
    %v140 = vld [vmem:[%s1 + $0x30] sm:$0xff]
    %v141 = vld [vmem:[%s1 + $0x38] sm:$0xff]
    %v142 = vld [vmem:[%s1 + $0x40] sm:$0xff]
    %v143 = vld [vmem:[%s1 + $0x48] sm:$0xff]
    %v144 = vld [vmem:[%s1 + $0x50] sm:$0xff]
    %v145 = vld [vmem:[%s1 + $0x58] sm:$0xff]
    %v146 = vld [vmem:[%s1 + $0x60] sm:$0xff]
    %v147 = vld [vmem:[%s1 + $0x68] sm:$0xff]
    %v148 = vld [vmem:[%s1 + $0x70] sm:$0xff]
    %v149 = vld [vmem:[%s1 + $0x78] sm:$0xff]
    %v150 = vld [vmem:[#allocation2] sm:$0x1]
    %v151 = vld [vmem:[%s3] sm:$0x1]
    %vm152 = vcmask 261120
    %v153 = vsel %vm152, %v132, 0.0
    %154 = vadd.xlane.f32.xlu0 %v153
    %v155 = vpop.xlane.xlu0 %154
    %v156 = vsel %vm152, %v133, 0.0
    %157 = vadd.xlane.f32.xlu0 %v156
    %v158 = vpop.xlane.xlu0 %157
    %v159 = vrcp.pop 32.0
    %v160 = vmul.f32 32.0, %v159
    %v161 = vsub.f32 1.0, %v160
    %v162 = vmul.f32 %v159, %v161
    %v163 = vadd.f32 %v159, %v162
    %vm164 = vweird.f32 %v159
    %v165 = vsel %vm164, %v159, %v163
    %v166 = vmul.f32 %v155, %v165
    %v167 = vmul.f32 %v158, %v165
    %v168 = vsub.f32 %v132, %v166
    %v169 = vsub.f32 %v133, %v167
    %v170 = vmul.f32 %v168, %v168
    %v171 = vmul.f32 %v169, %v169
    %v172 = vsel %vm152, %v170, 0.0
    %173 = vadd.xlane.f32.xlu0 %v172
    %v174 = vpop.xlane.xlu0 %173
    %v175 = vsel %vm152, %v171, 0.0
    %176 = vadd.xlane.f32.xlu0 %v175
    %v177 = vpop.xlane.xlu0 %176
    %v178 = vmul.f32 %v174, %v165
    %v179 = vmul.f32 %v177, %v165
    %v180 = vadd.f32 %v178, 1e-05
    %v181 = vadd.f32 %v179, 1e-05
    %v182 = vrsqrt.pop %v180
    %v183 = vmul.f32 %v182, %v180
    %v184 = vmul.f32 %v183, %v182
    %v185 = vmul.f32 0.5, %v184
    %v186 = vsub.f32 1.5, %v185
    %v187 = vmul.f32 %v182, %v186
    %vm188 = vweird.f32 %v180
    %vm189 = vweird.f32 %v182
    %vm190 = vmor %vm188, %vm189
    %v191 = vsel %vm190, %v182, %v187
    %v192 = vrsqrt.pop %v181
    %v193 = vmul.f32 %v192, %v181
    %v194 = vmul.f32 %v193, %v192
    %v195 = vmul.f32 0.5, %v194
    %v196 = vsub.f32 1.5, %v195
    %v197 = vmul.f32 %v192, %v196
    %vm198 = vweird.f32 %v181
    %vm199 = vweird.f32 %v192
    %vm200 = vmor %vm198, %vm199
    %v201 = vsel %vm200, %v192, %v197
    %v202 = vmul.f32 %v168, %v191
    %v203 = vmul.f32 %v169, %v201
    %v205 = vperm.slane %v150, 0
    %v207 = vmul.f32 %v202, %v205
    %v208 = vmul.f32 %v203, %v205
    %v210 = vperm.slane %v151, 0
    %v212 = vadd.f32 %v207, %v210
    %v213 = vadd.f32 %v208, %v210
    %v214 = vld [vmem:[%s6] sm:$0xf]
    %v215 = vld [vmem:[%s6 + $0x4] sm:$0xf]
    %v216 = vld [vmem:[%s6 + $0x8] sm:$0xf]
    %v217 = vld [vmem:[%s6 + $0xc] sm:$0xf]
    %v218 = vpack.c.bf16 %v213, %v212
    %v219 = vld [vmem:[%s7] sm:$0x1]
    %v221 = vperm.slane %v219, 0
    %v227 = vunpack.c.l.b16 %v214
    %v228 = vunpack.c.l.b16 %v215
    %v229 = vunpack.c.l.b16 %v216
    %v230 = vunpack.c.l.b16 %v217
    %v231 = vpack.c.b16 %v228, %v227
    %v232 = vpack.c.b16 %v230, %v229
    %v236 = vsel %vm152, %v218, 0
    %238 = vmatpush.bf16.msra.mxu0 0
    %239 = vmatpush.bf16.msra.mxu0 0
    %240 = vmatpush.bf16.msra.mxu0 0
    %241 = vmatpush.bf16.msra.mxu0 0
    %242 = vmatpush.bf16.msra.mxu0 0
    %243 = vmatpush.bf16.msra.mxu0 0
    %244 = vmatpush.bf16.msra.mxu0 %v232
    %245 = vmatpush.bf16.msra.mxu0 %v231
    %246 = vmatmul.bf16.gmra.mxu0 %v236
    %v247 = vpop.f32.mrf.mxu0
    %v248 = vadd.f32 %v221, %v247
    %v249 = vpop.f32.mrf.mxu0
    %v250 = vadd.f32 %v221, %v249
    %251 = vdwg.mxu0
    %v252 = vld [vmem:[%s4] sm:$0x1]
    %v253 = vld [vmem:[#allocation5] sm:$0x1]
    %v254 = vsel %vm152, %v134, 0.0
    %255 = vadd.xlane.f32.xlu0 %v254
    %v256 = vpop.xlane.xlu0 %255
    %v257 = vsel %vm152, %v135, 0.0
    %258 = vadd.xlane.f32.xlu0 %v257
    %v259 = vpop.xlane.xlu0 %258
    %v260 = vsel %vm152, %v136, 0.0
    %261 = vadd.xlane.f32.xlu0 %v260
    %v262 = vpop.xlane.xlu0 %261
    %v263 = vsel %vm152, %v137, 0.0
    %264 = vadd.xlane.f32.xlu0 %v263
    %v265 = vpop.xlane.xlu0 %264
    %v266 = vsel %vm152, %v138, 0.0
    %267 = vadd.xlane.f32.xlu0 %v266
    %v268 = vpop.xlane.xlu0 %267
    %v269 = vsel %vm152, %v139, 0.0
    %270 = vadd.xlane.f32.xlu0 %v269
    %v271 = vpop.xlane.xlu0 %270
    %v272 = vsel %vm152, %v140, 0.0
    %273 = vadd.xlane.f32.xlu0 %v272
    %v274 = vpop.xlane.xlu0 %273
    %v275 = vsel %vm152, %v141, 0.0
    %276 = vadd.xlane.f32.xlu0 %v275
    %v277 = vpop.xlane.xlu0 %276
    %v278 = vsel %vm152, %v142, 0.0
    %279 = vadd.xlane.f32.xlu0 %v278
    %v280 = vpop.xlane.xlu0 %279
    %v281 = vsel %vm152, %v143, 0.0
    %282 = vadd.xlane.f32.xlu0 %v281
    %v283 = vpop.xlane.xlu0 %282
    %v284 = vsel %vm152, %v144, 0.0
    %285 = vadd.xlane.f32.xlu0 %v284
    %v286 = vpop.xlane.xlu0 %285
    %v287 = vsel %vm152, %v145, 0.0
    %288 = vadd.xlane.f32.xlu0 %v287
    %v289 = vpop.xlane.xlu0 %288
    %v290 = vsel %vm152, %v146, 0.0
    %291 = vadd.xlane.f32.xlu0 %v290
    %v292 = vpop.xlane.xlu0 %291
    %v293 = vsel %vm152, %v147, 0.0
    %294 = vadd.xlane.f32.xlu0 %v293
    %v295 = vpop.xlane.xlu0 %294
    %v296 = vsel %vm152, %v148, 0.0
    %297 = vadd.xlane.f32.xlu0 %v296
    %v298 = vpop.xlane.xlu0 %297
    %v299 = vsel %vm152, %v149, 0.0
    %300 = vadd.xlane.f32.xlu0 %v299
    %v301 = vpop.xlane.xlu0 %300
    %v302 = vmul.f32 %v256, %v165
    %v303 = vmul.f32 %v259, %v165
    %v304 = vmul.f32 %v262, %v165
    %v305 = vmul.f32 %v265, %v165
    %v306 = vmul.f32 %v268, %v165
    %v307 = vmul.f32 %v271, %v165
    %v308 = vmul.f32 %v274, %v165
    %v309 = vmul.f32 %v277, %v165
    %v310 = vmul.f32 %v280, %v165
    %v311 = vmul.f32 %v283, %v165
    %v312 = vmul.f32 %v286, %v165
    %v313 = vmul.f32 %v289, %v165
    %v314 = vmul.f32 %v292, %v165
    %v315 = vmul.f32 %v295, %v165
    %v316 = vmul.f32 %v298, %v165
    %v317 = vmul.f32 %v301, %v165
    %v318 = vsub.f32 %v134, %v302
    %v319 = vsub.f32 %v135, %v303
    %v320 = vsub.f32 %v136, %v304
    %v321 = vsub.f32 %v137, %v305
    %v322 = vsub.f32 %v138, %v306
    %v323 = vsub.f32 %v139, %v307
    %v324 = vsub.f32 %v140, %v308
    %v325 = vsub.f32 %v141, %v309
    %v326 = vsub.f32 %v142, %v310
    %v327 = vsub.f32 %v143, %v311
    %v328 = vsub.f32 %v144, %v312
    %v329 = vsub.f32 %v145, %v313
    %v330 = vsub.f32 %v146, %v314
    %v331 = vsub.f32 %v147, %v315
    %v332 = vsub.f32 %v148, %v316
    %v333 = vsub.f32 %v149, %v317
    %v334 = vmul.f32 %v318, %v318
    %v335 = vmul.f32 %v319, %v319
    %v336 = vmul.f32 %v320, %v320
    %v337 = vmul.f32 %v321, %v321
    %v338 = vmul.f32 %v322, %v322
    %v339 = vmul.f32 %v323, %v323
    %v340 = vmul.f32 %v324, %v324
    %v341 = vmul.f32 %v325, %v325
    %v342 = vmul.f32 %v326, %v326
    %v343 = vmul.f32 %v327, %v327
    %v344 = vmul.f32 %v328, %v328
    %v345 = vmul.f32 %v329, %v329
    %v346 = vmul.f32 %v330, %v330
    %v347 = vmul.f32 %v331, %v331
    %v348 = vmul.f32 %v332, %v332
    %v349 = vmul.f32 %v333, %v333
    %v350 = vsel %vm152, %v334, 0.0
    %351 = vadd.xlane.f32.xlu0 %v350
    %v352 = vpop.xlane.xlu0 %351
    %v353 = vsel %vm152, %v335, 0.0
    %354 = vadd.xlane.f32.xlu0 %v353
    %v355 = vpop.xlane.xlu0 %354
    %v356 = vsel %vm152, %v336, 0.0
    %357 = vadd.xlane.f32.xlu0 %v356
    %v358 = vpop.xlane.xlu0 %357
    %v359 = vsel %vm152, %v337, 0.0
    %360 = vadd.xlane.f32.xlu0 %v359
    %v361 = vpop.xlane.xlu0 %360
    %v362 = vsel %vm152, %v338, 0.0
    %363 = vadd.xlane.f32.xlu0 %v362
    %v364 = vpop.xlane.xlu0 %363
    %v365 = vsel %vm152, %v339, 0.0
    %366 = vadd.xlane.f32.xlu0 %v365
    %v367 = vpop.xlane.xlu0 %366
    %v368 = vsel %vm152, %v340, 0.0
    %369 = vadd.xlane.f32.xlu0 %v368
    %v370 = vpop.xlane.xlu0 %369
    %v371 = vsel %vm152, %v341, 0.0
    %372 = vadd.xlane.f32.xlu0 %v371
    %v373 = vpop.xlane.xlu0 %372
    %v374 = vsel %vm152, %v342, 0.0
    %375 = vadd.xlane.f32.xlu0 %v374
    %v376 = vpop.xlane.xlu0 %375
    %v377 = vsel %vm152, %v343, 0.0
    %378 = vadd.xlane.f32.xlu0 %v377
    %v379 = vpop.xlane.xlu0 %378
    %v380 = vsel %vm152, %v344, 0.0
    %381 = vadd.xlane.f32.xlu0 %v380
    %v382 = vpop.xlane.xlu0 %381
    %v383 = vsel %vm152, %v345, 0.0
    %384 = vadd.xlane.f32.xlu0 %v383
    %v385 = vpop.xlane.xlu0 %384
    %v386 = vsel %vm152, %v346, 0.0
    %387 = vadd.xlane.f32.xlu0 %v386
    %v388 = vpop.xlane.xlu0 %387
    %v389 = vsel %vm152, %v347, 0.0
    %390 = vadd.xlane.f32.xlu0 %v389
    %v391 = vpop.xlane.xlu0 %390
    %v392 = vsel %vm152, %v348, 0.0
    %393 = vadd.xlane.f32.xlu0 %v392
    %v394 = vpop.xlane.xlu0 %393
    %v395 = vsel %vm152, %v349, 0.0
    %396 = vadd.xlane.f32.xlu0 %v395
    %v397 = vpop.xlane.xlu0 %396
    %v398 = vmul.f32 %v352, %v165
    %v399 = vmul.f32 %v355, %v165
    %v400 = vmul.f32 %v358, %v165
    %v401 = vmul.f32 %v361, %v165
    %v402 = vmul.f32 %v364, %v165
    %v403 = vmul.f32 %v367, %v165
    %v404 = vmul.f32 %v370, %v165
    %v405 = vmul.f32 %v373, %v165
    %v406 = vmul.f32 %v376, %v165
    %v407 = vmul.f32 %v379, %v165
    %v408 = vmul.f32 %v382, %v165
    %v409 = vmul.f32 %v385, %v165
    %v410 = vmul.f32 %v388, %v165
    %v411 = vmul.f32 %v391, %v165
    %v412 = vmul.f32 %v394, %v165
    %v413 = vmul.f32 %v397, %v165
    %v414 = vadd.f32 %v398, 1e-05
    %v415 = vadd.f32 %v399, 1e-05
    %v416 = vadd.f32 %v400, 1e-05
    %v417 = vadd.f32 %v401, 1e-05
    %v418 = vadd.f32 %v402, 1e-05
    %v419 = vadd.f32 %v403, 1e-05
    %v420 = vadd.f32 %v404, 1e-05
    %v421 = vadd.f32 %v405, 1e-05
    %v422 = vadd.f32 %v406, 1e-05
    %v423 = vadd.f32 %v407, 1e-05
    %v424 = vadd.f32 %v408, 1e-05
    %v425 = vadd.f32 %v409, 1e-05
    %v426 = vadd.f32 %v410, 1e-05
    %v427 = vadd.f32 %v411, 1e-05
    %v428 = vadd.f32 %v412, 1e-05
    %v429 = vadd.f32 %v413, 1e-05
    %v430 = vrsqrt.pop %v414
    %v431 = vmul.f32 %v430, %v414
    %v432 = vmul.f32 %v431, %v430
    %v433 = vmul.f32 0.5, %v432
    %v434 = vsub.f32 1.5, %v433
    %v435 = vmul.f32 %v430, %v434
    %vm436 = vweird.f32 %v414
    %vm437 = vweird.f32 %v430
    %vm438 = vmor %vm436, %vm437
    %v439 = vsel %vm438, %v430, %v435
    %v440 = vrsqrt.pop %v415
    %v441 = vmul.f32 %v440, %v415
    %v442 = vmul.f32 %v441, %v440
    %v443 = vmul.f32 0.5, %v442
    %v444 = vsub.f32 1.5, %v443
    %v445 = vmul.f32 %v440, %v444
    %vm446 = vweird.f32 %v415
    %vm447 = vweird.f32 %v440
    %vm448 = vmor %vm446, %vm447
    %v449 = vsel %vm448, %v440, %v445
    %v450 = vrsqrt.pop %v416
    %v451 = vmul.f32 %v450, %v416
    %v452 = vmul.f32 %v451, %v450
    %v453 = vmul.f32 0.5, %v452
    %v454 = vsub.f32 1.5, %v453
    %v455 = vmul.f32 %v450, %v454
    %vm456 = vweird.f32 %v416
    %vm457 = vweird.f32 %v450
    %vm458 = vmor %vm456, %vm457
    %v459 = vsel %vm458, %v450, %v455
    %v460 = vrsqrt.pop %v417
    %v461 = vmul.f32 %v460, %v417
    %v462 = vmul.f32 %v461, %v460
    %v463 = vmul.f32 0.5, %v462
    %v464 = vsub.f32 1.5, %v463
    %v465 = vmul.f32 %v460, %v464
    %vm466 = vweird.f32 %v417
    %vm467 = vweird.f32 %v460
    %vm468 = vmor %vm466, %vm467
    %v469 = vsel %vm468, %v460, %v465
    %v470 = vrsqrt.pop %v418
    %v471 = vmul.f32 %v470, %v418
    %v472 = vmul.f32 %v471, %v470
    %v473 = vmul.f32 0.5, %v472
    %v474 = vsub.f32 1.5, %v473
    %v475 = vmul.f32 %v470, %v474
    %vm476 = vweird.f32 %v418
    %vm477 = vweird.f32 %v470
    %vm478 = vmor %vm476, %vm477
    %v479 = vsel %vm478, %v470, %v475
    %v480 = vrsqrt.pop %v419
    %v481 = vmul.f32 %v480, %v419
    %v482 = vmul.f32 %v481, %v480
    %v483 = vmul.f32 0.5, %v482
    %v484 = vsub.f32 1.5, %v483
    %v485 = vmul.f32 %v480, %v484
    %vm486 = vweird.f32 %v419
    %vm487 = vweird.f32 %v480
    %vm488 = vmor %vm486, %vm487
    %v489 = vsel %vm488, %v480, %v485
    %v490 = vrsqrt.pop %v420
    %v491 = vmul.f32 %v490, %v420
    %v492 = vmul.f32 %v491, %v490
    %v493 = vmul.f32 0.5, %v492
    %v494 = vsub.f32 1.5, %v493
    %v495 = vmul.f32 %v490, %v494
    %vm496 = vweird.f32 %v420
    %vm497 = vweird.f32 %v490
    %vm498 = vmor %vm496, %vm497
    %v499 = vsel %vm498, %v490, %v495
    %v500 = vrsqrt.pop %v421
    %v501 = vmul.f32 %v500, %v421
    %v502 = vmul.f32 %v501, %v500
    %v503 = vmul.f32 0.5, %v502
    %v504 = vsub.f32 1.5, %v503
    %v505 = vmul.f32 %v500, %v504
    %vm506 = vweird.f32 %v421
    %vm507 = vweird.f32 %v500
    %vm508 = vmor %vm506, %vm507
    %v509 = vsel %vm508, %v500, %v505
    %v510 = vrsqrt.pop %v422
    %v511 = vmul.f32 %v510, %v422
    %v512 = vmul.f32 %v511, %v510
    %v513 = vmul.f32 0.5, %v512
    %v514 = vsub.f32 1.5, %v513
    %v515 = vmul.f32 %v510, %v514
    %vm516 = vweird.f32 %v422
    %vm517 = vweird.f32 %v510
    %vm518 = vmor %vm516, %vm517
    %v519 = vsel %vm518, %v510, %v515
    %v520 = vrsqrt.pop %v423
    %v521 = vmul.f32 %v520, %v423
    %v522 = vmul.f32 %v521, %v520
    %v523 = vmul.f32 0.5, %v522
    %v524 = vsub.f32 1.5, %v523
    %v525 = vmul.f32 %v520, %v524
    %vm526 = vweird.f32 %v423
    %vm527 = vweird.f32 %v520
    %vm528 = vmor %vm526, %vm527
    %v529 = vsel %vm528, %v520, %v525
    %v530 = vrsqrt.pop %v424
    %v531 = vmul.f32 %v530, %v424
    %v532 = vmul.f32 %v531, %v530
    %v533 = vmul.f32 0.5, %v532
    %v534 = vsub.f32 1.5, %v533
    %v535 = vmul.f32 %v530, %v534
    %vm536 = vweird.f32 %v424
    %vm537 = vweird.f32 %v530
    %vm538 = vmor %vm536, %vm537
    %v539 = vsel %vm538, %v530, %v535
    %v540 = vrsqrt.pop %v425
    %v541 = vmul.f32 %v540, %v425
    %v542 = vmul.f32 %v541, %v540
    %v543 = vmul.f32 0.5, %v542
    %v544 = vsub.f32 1.5, %v543
    %v545 = vmul.f32 %v540, %v544
    %vm546 = vweird.f32 %v425
    %vm547 = vweird.f32 %v540
    %vm548 = vmor %vm546, %vm547
    %v549 = vsel %vm548, %v540, %v545
    %v550 = vrsqrt.pop %v426
    %v551 = vmul.f32 %v550, %v426
    %v552 = vmul.f32 %v551, %v550
    %v553 = vmul.f32 0.5, %v552
    %v554 = vsub.f32 1.5, %v553
    %v555 = vmul.f32 %v550, %v554
    %vm556 = vweird.f32 %v426
    %vm557 = vweird.f32 %v550
    %vm558 = vmor %vm556, %vm557
    %v559 = vsel %vm558, %v550, %v555
    %v560 = vrsqrt.pop %v427
    %v561 = vmul.f32 %v560, %v427
    %v562 = vmul.f32 %v561, %v560
    %v563 = vmul.f32 0.5, %v562
    %v564 = vsub.f32 1.5, %v563
    %v565 = vmul.f32 %v560, %v564
    %vm566 = vweird.f32 %v427
    %vm567 = vweird.f32 %v560
    %vm568 = vmor %vm566, %vm567
    %v569 = vsel %vm568, %v560, %v565
    %v570 = vrsqrt.pop %v428
    %v571 = vmul.f32 %v570, %v428
    %v572 = vmul.f32 %v571, %v570
    %v573 = vmul.f32 0.5, %v572
    %v574 = vsub.f32 1.5, %v573
    %v575 = vmul.f32 %v570, %v574
    %vm576 = vweird.f32 %v428
    %vm577 = vweird.f32 %v570
    %vm578 = vmor %vm576, %vm577
    %v579 = vsel %vm578, %v570, %v575
    %v580 = vrsqrt.pop %v429
    %v581 = vmul.f32 %v580, %v429
    %v582 = vmul.f32 %v581, %v580
    %v583 = vmul.f32 0.5, %v582
    %v584 = vsub.f32 1.5, %v583
    %v585 = vmul.f32 %v580, %v584
    %vm586 = vweird.f32 %v429
    %vm587 = vweird.f32 %v580
    %vm588 = vmor %vm586, %vm587
    %v589 = vsel %vm588, %v580, %v585
    %v590 = vmul.f32 %v318, %v439
    %v591 = vmul.f32 %v319, %v449
    %v592 = vmul.f32 %v320, %v459
    %v593 = vmul.f32 %v321, %v469
    %v594 = vmul.f32 %v322, %v479
    %v595 = vmul.f32 %v323, %v489
    %v596 = vmul.f32 %v324, %v499
    %v597 = vmul.f32 %v325, %v509
    %v598 = vmul.f32 %v326, %v519
    %v599 = vmul.f32 %v327, %v529
    %v600 = vmul.f32 %v328, %v539
    %v601 = vmul.f32 %v329, %v549
    %v602 = vmul.f32 %v330, %v559
    %v603 = vmul.f32 %v331, %v569
    %v604 = vmul.f32 %v332, %v579
    %v605 = vmul.f32 %v333, %v589
    %v607 = vperm.slane %v252, 0
    %v609 = vmul.f32 %v590, %v607
    %v610 = vmul.f32 %v591, %v607
    %v611 = vmul.f32 %v592, %v607
    %v612 = vmul.f32 %v593, %v607
    %v613 = vmul.f32 %v594, %v607
    %v614 = vmul.f32 %v595, %v607
    %v615 = vmul.f32 %v596, %v607
    %v616 = vmul.f32 %v597, %v607
    %v617 = vmul.f32 %v598, %v607
    %v618 = vmul.f32 %v599, %v607
    %v619 = vmul.f32 %v600, %v607
    %v620 = vmul.f32 %v601, %v607
    %v621 = vmul.f32 %v602, %v607
    %v622 = vmul.f32 %v603, %v607
    %v623 = vmul.f32 %v604, %v607
    %v624 = vmul.f32 %v605, %v607
    %v626 = vperm.slane %v253, 0
    %v628 = vadd.f32 %v609, %v626
    %v629 = vadd.f32 %v610, %v626
    %v630 = vadd.f32 %v611, %v626
    %v631 = vadd.f32 %v612, %v626
    %v632 = vadd.f32 %v613, %v626
    %v633 = vadd.f32 %v614, %v626
    %v634 = vadd.f32 %v615, %v626
    %v635 = vadd.f32 %v616, %v626
    %v636 = vadd.f32 %v617, %v626
    %v637 = vadd.f32 %v618, %v626
    %v638 = vadd.f32 %v619, %v626
    %v639 = vadd.f32 %v620, %v626
    %v640 = vadd.f32 %v621, %v626
    %v641 = vadd.f32 %v622, %v626
    %v642 = vadd.f32 %v623, %v626
    %v643 = vadd.f32 %v624, %v626
    %v644 = vld [vmem:[%s8] sm:$0xf]
    %v645 = vld [vmem:[%s8 + $0x4] sm:$0xf]
    %v646 = vld [vmem:[%s8 + $0x8] sm:$0xf]
    %v647 = vld [vmem:[%s8 + $0xc] sm:$0xf]
    %v648 = vpack.c.bf16 %v629, %v628
    %v649 = vpack.c.bf16 %v631, %v630
    %v650 = vpack.c.bf16 %v633, %v632
    %v651 = vpack.c.bf16 %v635, %v634
    %v652 = vpack.c.bf16 %v637, %v636
    %v653 = vpack.c.bf16 %v639, %v638
    %v654 = vpack.c.bf16 %v641, %v640
    %v655 = vpack.c.bf16 %v643, %v642
    %v656 = vld [vmem:[%s9] sm:$0x1]
    %v658 = vperm.slane %v656, 0
    %v664 = vunpack.c.l.b16 %v644
    %v665 = vunpack.c.l.b16 %v645
    %v666 = vunpack.c.l.b16 %v646
    %v667 = vunpack.c.l.b16 %v647
    %v668 = vpack.c.b16 %v665, %v664
    %v669 = vpack.c.b16 %v667, %v666
    %v673 = vsel %vm152, %v648, 0
    %v676 = vsel %vm152, %v649, 0
    %v679 = vsel %vm152, %v650, 0
    %v682 = vsel %vm152, %v651, 0
    %v685 = vsel %vm152, %v652, 0
    %v688 = vsel %vm152, %v653, 0
    %v691 = vsel %vm152, %v654, 0
    %v694 = vsel %vm152, %v655, 0
    %696 = vmatpush.bf16.msra.mxu0 0
    %697 = vmatpush.bf16.msra.mxu0 0
    %698 = vmatpush.bf16.msra.mxu0 0
    %699 = vmatpush.bf16.msra.mxu0 0
    %700 = vmatpush.bf16.msra.mxu0 0
    %701 = vmatpush.bf16.msra.mxu0 0
    %702 = vmatpush.bf16.msra.mxu0 %v669
    %703 = vmatpush.bf16.msra.mxu0 %v668
    %704 = vmatmul.bf16.gmra.mxu0 %v673
    %v705 = vpop.f32.mrf.mxu0
    %v706 = vadd.f32 %v658, %v705
    %v707 = vpop.f32.mrf.mxu0
    %v708 = vadd.f32 %v658, %v707
    %709 = vmatmul.bf16.gmra.mxu0 %v676
    %v710 = vpop.f32.mrf.mxu0
    %v711 = vadd.f32 %v658, %v710
    %v712 = vpop.f32.mrf.mxu0
    %v713 = vadd.f32 %v658, %v712
    %714 = vmatmul.bf16.gmra.mxu0 %v679
    %v715 = vpop.f32.mrf.mxu0
    %v716 = vadd.f32 %v658, %v715
    %v717 = vpop.f32.mrf.mxu0
    %v718 = vadd.f32 %v658, %v717
    %719 = vmatmul.bf16.gmra.mxu0 %v682
    %v720 = vpop.f32.mrf.mxu0
    %v721 = vadd.f32 %v658, %v720
    %v722 = vpop.f32.mrf.mxu0
    %v723 = vadd.f32 %v658, %v722
    %724 = vmatmul.bf16.gmra.mxu0 %v685
    %v725 = vpop.f32.mrf.mxu0
    %v726 = vadd.f32 %v658, %v725
    %v727 = vpop.f32.mrf.mxu0
    %v728 = vadd.f32 %v658, %v727
    %729 = vmatmul.bf16.gmra.mxu0 %v688
    %v730 = vpop.f32.mrf.mxu0
    %v731 = vadd.f32 %v658, %v730
    %v732 = vpop.f32.mrf.mxu0
    %v733 = vadd.f32 %v658, %v732
    %734 = vmatmul.bf16.gmra.mxu0 %v691
    %v735 = vpop.f32.mrf.mxu0
    %v736 = vadd.f32 %v658, %v735
    %v737 = vpop.f32.mrf.mxu0
    %v738 = vadd.f32 %v658, %v737
    %739 = vmatmul.bf16.gmra.mxu0 %v694
    %v740 = vpop.f32.mrf.mxu0
    %v741 = vadd.f32 %v658, %v740
    %v742 = vpop.f32.mrf.mxu0
    %v743 = vadd.f32 %v658, %v742
    %744 = vdwg.mxu0
    %v745 = vld [vmem:[%s10] sm:$0xf]
    %v746 = vld [vmem:[%s10 + $0x4] sm:$0xf]
    %v747 = vld [vmem:[%s10 + $0x8] sm:$0xf]
    %v748 = vld [vmem:[%s10 + $0xc] sm:$0xf]
    %v749 = vld [vmem:[#allocation7] sm:$0x1]
    %v751 = vperm.slane %v749, 0
    %v757 = vunpack.c.l.b16 %v745
    %v758 = vunpack.c.l.b16 %v746
    %v759 = vunpack.c.l.b16 %v747
    %v760 = vunpack.c.l.b16 %v748
    %v761 = vpack.c.b16 %v758, %v757
    %v762 = vpack.c.b16 %v760, %v759
    %765 = vmatpush.bf16.msra.mxu0 0
    %766 = vmatpush.bf16.msra.mxu0 0
    %767 = vmatpush.bf16.msra.mxu0 0
    %768 = vmatpush.bf16.msra.mxu0 0
    %769 = vmatpush.bf16.msra.mxu0 0
    %770 = vmatpush.bf16.msra.mxu0 0
    %771 = vmatpush.bf16.msra.mxu0 %v762
    %772 = vmatpush.bf16.msra.mxu0 %v761
    %773 = vmatmul.bf16.gmra.mxu0 %v673
    %v774 = vpop.f32.mrf.mxu0
    %v775 = vadd.f32 %v751, %v774
    %v776 = vpop.f32.mrf.mxu0
    %v777 = vadd.f32 %v751, %v776
    %778 = vmatmul.bf16.gmra.mxu0 %v676
    %v779 = vpop.f32.mrf.mxu0
    %v780 = vadd.f32 %v751, %v779
    %v781 = vpop.f32.mrf.mxu0
    %v782 = vadd.f32 %v751, %v781
    %783 = vmatmul.bf16.gmra.mxu0 %v679
    %v784 = vpop.f32.mrf.mxu0
    %v785 = vadd.f32 %v751, %v784
    %v786 = vpop.f32.mrf.mxu0
    %v787 = vadd.f32 %v751, %v786
    %788 = vmatmul.bf16.gmra.mxu0 %v682
    %v789 = vpop.f32.mrf.mxu0
    %v790 = vadd.f32 %v751, %v789
    %v791 = vpop.f32.mrf.mxu0
    %v792 = vadd.f32 %v751, %v791
    %793 = vmatmul.bf16.gmra.mxu0 %v685
    %v794 = vpop.f32.mrf.mxu0
    %v795 = vadd.f32 %v751, %v794
    %v796 = vpop.f32.mrf.mxu0
    %v797 = vadd.f32 %v751, %v796
    %798 = vmatmul.bf16.gmra.mxu0 %v688
    %v799 = vpop.f32.mrf.mxu0
    %v800 = vadd.f32 %v751, %v799
    %v801 = vpop.f32.mrf.mxu0
    %v802 = vadd.f32 %v751, %v801
    %803 = vmatmul.bf16.gmra.mxu0 %v691
    %v804 = vpop.f32.mrf.mxu0
    %v805 = vadd.f32 %v751, %v804
    %v806 = vpop.f32.mrf.mxu0
    %v807 = vadd.f32 %v751, %v806
    %808 = vmatmul.bf16.gmra.mxu0 %v694
    %v809 = vpop.f32.mrf.mxu0
    %v810 = vadd.f32 %v751, %v809
    %v811 = vpop.f32.mrf.mxu0
    %v812 = vadd.f32 %v751, %v811
    %813 = vdwg.mxu0
    %v816 = vrot.slane %v248, 1
    %v817 = vrot.slane %v248, 2
    %v818 = vrot.slane %v248, 3
    %v819 = vrot.slane %v248, 4
    %v820 = vrot.slane %v248, 5
    %v821 = vrot.slane %v248, 6
    %v822 = vrot.slane %v248, 7
    %v823 = vrot.slane %v250, 1
    %v824 = vrot.slane %v250, 2
    %v825 = vrot.slane %v250, 3
    %v826 = vrot.slane %v250, 4
    %v827 = vrot.slane %v250, 5
    %v828 = vrot.slane %v250, 6
    %v829 = vrot.slane %v250, 7
    %v830 = vperm.slane %v248, 0
    %v831 = vperm.slane %v816, 0
    %v832 = vperm.slane %v817, 0
    %v833 = vperm.slane %v818, 0
    %v834 = vperm.slane %v819, 0
    %v835 = vperm.slane %v820, 0
    %v836 = vperm.slane %v821, 0
    %v837 = vperm.slane %v822, 0
    %v838 = vperm.slane %v250, 0
    %v839 = vperm.slane %v823, 0
    %v840 = vperm.slane %v824, 0
    %v841 = vperm.slane %v825, 0
    %v842 = vperm.slane %v826, 0
    %v843 = vperm.slane %v827, 0
    %v844 = vperm.slane %v828, 0
    %v845 = vperm.slane %v829, 0
    %v862 = vmul.f32 %v830, %v706
    %v863 = vmul.f32 %v831, %v708
    %v864 = vmul.f32 %v832, %v711
    %v865 = vmul.f32 %v833, %v713
    %v866 = vmul.f32 %v834, %v716
    %v867 = vmul.f32 %v835, %v718
    %v868 = vmul.f32 %v836, %v721
    %v869 = vmul.f32 %v837, %v723
    %v870 = vmul.f32 %v838, %v726
    %v871 = vmul.f32 %v839, %v728
    %v872 = vmul.f32 %v840, %v731
    %v873 = vmul.f32 %v841, %v733
    %v874 = vmul.f32 %v842, %v736
    %v875 = vmul.f32 %v843, %v738
    %v876 = vmul.f32 %v844, %v741
    %v877 = vmul.f32 %v845, %v743
    %v878 = vld [vmem:[%s12] sm:$0xff]
    %v879 = vld [vmem:[%s12 + $0x8] sm:$0xff]
    %v880 = vld [vmem:[%s12 + $0x10] sm:$0xff]
    %v881 = vld [vmem:[%s12 + $0x18] sm:$0xff]
    %v883 = vsel %vm152, %v862, 0
    %v886 = vsel %vm152, %v863, 0
    %v889 = vsel %vm152, %v864, 0
    %v892 = vsel %vm152, %v865, 0
    %v895 = vsel %vm152, %v866, 0
    %v898 = vsel %vm152, %v867, 0
    %v901 = vsel %vm152, %v868, 0
    %v904 = vsel %vm152, %v869, 0
    %v907 = vsel %vm152, %v870, 0
    %v910 = vsel %vm152, %v871, 0
    %v913 = vsel %vm152, %v872, 0
    %v916 = vsel %vm152, %v873, 0
    %v919 = vsel %vm152, %v874, 0
    %v922 = vsel %vm152, %v875, 0
    %v925 = vsel %vm152, %v876, 0
    %v928 = vsel %vm152, %v877, 0
    %930 = vmatpush.msra.mxu0 0.0
    %931 = vmatpush.msra.mxu0 0.0
    %932 = vmatpush.msra.mxu0 0.0
    %933 = vmatpush.msra.mxu0 0.0
    %934 = vmatpush.msra.mxu0 0.0
    %935 = vmatpush.msra.mxu0 0.0
    %936 = vmatpush.msra.mxu0 0.0
    %937 = vmatpush.msra.mxu0 0.0
    %938 = vmatpush.msra.mxu0 0.0
    %939 = vmatpush.msra.mxu0 0.0
    %940 = vmatpush.msra.mxu0 0.0
    %941 = vmatpush.msra.mxu0 0.0
    %942 = vmatpush.msra.mxu0 %v881
    %943 = vmatpush.msra.mxu0 %v880
    %944 = vmatpush.msra.mxu0 %v879
    %945 = vmatpush.msra.mxu0 %v878
    %946 = vmatmul.f32.gmra.mxu0 %v883
    %v947 = vpop.f32.mrf.mxu0
    %v948 = vadd.f32 0.0, %v947
    %949 = vmatmul.f32.gmra.mxu0 %v886
    %v950 = vpop.f32.mrf.mxu0
    %v951 = vadd.f32 0.0, %v950
    %952 = vmatmul.f32.gmra.mxu0 %v889
    %v953 = vpop.f32.mrf.mxu0
    %v954 = vadd.f32 0.0, %v953
    %955 = vmatmul.f32.gmra.mxu0 %v892
    %v956 = vpop.f32.mrf.mxu0
    %v957 = vadd.f32 0.0, %v956
    %958 = vmatmul.f32.gmra.mxu0 %v895
    %v959 = vpop.f32.mrf.mxu0
    %v960 = vadd.f32 0.0, %v959
    %961 = vmatmul.f32.gmra.mxu0 %v898
    %v962 = vpop.f32.mrf.mxu0
    %v963 = vadd.f32 0.0, %v962
    %964 = vmatmul.f32.gmra.mxu0 %v901
    %v965 = vpop.f32.mrf.mxu0
    %v966 = vadd.f32 0.0, %v965
    %967 = vmatmul.f32.gmra.mxu0 %v904
    %v968 = vpop.f32.mrf.mxu0
    %v969 = vadd.f32 0.0, %v968
    %970 = vmatmul.f32.gmra.mxu0 %v907
    %v971 = vpop.f32.mrf.mxu0
    %v972 = vadd.f32 0.0, %v971
    %973 = vmatmul.f32.gmra.mxu0 %v910
    %v974 = vpop.f32.mrf.mxu0
    %v975 = vadd.f32 0.0, %v974
    %976 = vmatmul.f32.gmra.mxu0 %v913
    %v977 = vpop.f32.mrf.mxu0
    %v978 = vadd.f32 0.0, %v977
    %979 = vmatmul.f32.gmra.mxu0 %v916
    %v980 = vpop.f32.mrf.mxu0
    %v981 = vadd.f32 0.0, %v980
    %982 = vmatmul.f32.gmra.mxu0 %v919
    %v983 = vpop.f32.mrf.mxu0
    %v984 = vadd.f32 0.0, %v983
    %985 = vmatmul.f32.gmra.mxu0 %v922
    %v986 = vpop.f32.mrf.mxu0
    %v987 = vadd.f32 0.0, %v986
    %988 = vmatmul.f32.gmra.mxu0 %v925
    %v989 = vpop.f32.mrf.mxu0
    %v990 = vadd.f32 0.0, %v989
    %991 = vmatmul.f32.gmra.mxu0 %v928
    %v992 = vpop.f32.mrf.mxu0
    %v993 = vadd.f32 0.0, %v992
    %994 = vdwg.mxu0
    %vm995 = vcmask 31744
    %v996 = vsel %vm995, %v948, -inf
    %v997 = vrot.slane %v996, 4
    %v998 = vmax.f32 %v996, %v997
    %v999 = vrot.slane %v998, 2
    %v1000 = vmax.f32 %v998, %v999
    %v1001 = vrot.slane %v1000, 1
    %v1002 = vmax.f32 %v1000, %v1001
    %v1003 = vsel %vm995, %v951, -inf
    %v1004 = vrot.slane %v1003, 4
    %v1005 = vmax.f32 %v1003, %v1004
    %v1006 = vrot.slane %v1005, 2
    %v1007 = vmax.f32 %v1005, %v1006
    %v1008 = vrot.slane %v1007, 1
    %v1009 = vmax.f32 %v1007, %v1008
    %v1010 = vsel %vm995, %v954, -inf
    %v1011 = vrot.slane %v1010, 4
    %v1012 = vmax.f32 %v1010, %v1011
    %v1013 = vrot.slane %v1012, 2
    %v1014 = vmax.f32 %v1012, %v1013
    %v1015 = vrot.slane %v1014, 1
    %v1016 = vmax.f32 %v1014, %v1015
    %v1017 = vsel %vm995, %v957, -inf
    %v1018 = vrot.slane %v1017, 4
    %v1019 = vmax.f32 %v1017, %v1018
    %v1020 = vrot.slane %v1019, 2
    %v1021 = vmax.f32 %v1019, %v1020
    %v1022 = vrot.slane %v1021, 1
    %v1023 = vmax.f32 %v1021, %v1022
    %v1024 = vsel %vm995, %v960, -inf
    %v1025 = vrot.slane %v1024, 4
    %v1026 = vmax.f32 %v1024, %v1025
    %v1027 = vrot.slane %v1026, 2
    %v1028 = vmax.f32 %v1026, %v1027
    %v1029 = vrot.slane %v1028, 1
    %v1030 = vmax.f32 %v1028, %v1029
    %v1031 = vsel %vm995, %v963, -inf
    %v1032 = vrot.slane %v1031, 4
    %v1033 = vmax.f32 %v1031, %v1032
    %v1034 = vrot.slane %v1033, 2
    %v1035 = vmax.f32 %v1033, %v1034
    %v1036 = vrot.slane %v1035, 1
    %v1037 = vmax.f32 %v1035, %v1036
    %v1038 = vsel %vm995, %v966, -inf
    %v1039 = vrot.slane %v1038, 4
    %v1040 = vmax.f32 %v1038, %v1039
    %v1041 = vrot.slane %v1040, 2
    %v1042 = vmax.f32 %v1040, %v1041
    %v1043 = vrot.slane %v1042, 1
    %v1044 = vmax.f32 %v1042, %v1043
    %v1045 = vsel %vm995, %v969, -inf
    %v1046 = vrot.slane %v1045, 4
    %v1047 = vmax.f32 %v1045, %v1046
    %v1048 = vrot.slane %v1047, 2
    %v1049 = vmax.f32 %v1047, %v1048
    %v1050 = vrot.slane %v1049, 1
    %v1051 = vmax.f32 %v1049, %v1050
    %v1052 = vsel %vm995, %v972, -inf
    %v1053 = vrot.slane %v1052, 4
    %v1054 = vmax.f32 %v1052, %v1053
    %v1055 = vrot.slane %v1054, 2
    %v1056 = vmax.f32 %v1054, %v1055
    %v1057 = vrot.slane %v1056, 1
    %v1058 = vmax.f32 %v1056, %v1057
    %v1059 = vsel %vm995, %v975, -inf
    %v1060 = vrot.slane %v1059, 4
    %v1061 = vmax.f32 %v1059, %v1060
    %v1062 = vrot.slane %v1061, 2
    %v1063 = vmax.f32 %v1061, %v1062
    %v1064 = vrot.slane %v1063, 1
    %v1065 = vmax.f32 %v1063, %v1064
    %v1066 = vsel %vm995, %v978, -inf
    %v1067 = vrot.slane %v1066, 4
    %v1068 = vmax.f32 %v1066, %v1067
    %v1069 = vrot.slane %v1068, 2
    %v1070 = vmax.f32 %v1068, %v1069
    %v1071 = vrot.slane %v1070, 1
    %v1072 = vmax.f32 %v1070, %v1071
    %v1073 = vsel %vm995, %v981, -inf
    %v1074 = vrot.slane %v1073, 4
    %v1075 = vmax.f32 %v1073, %v1074
    %v1076 = vrot.slane %v1075, 2
    %v1077 = vmax.f32 %v1075, %v1076
    %v1078 = vrot.slane %v1077, 1
    %v1079 = vmax.f32 %v1077, %v1078
    %v1080 = vsel %vm995, %v984, -inf
    %v1081 = vrot.slane %v1080, 4
    %v1082 = vmax.f32 %v1080, %v1081
    %v1083 = vrot.slane %v1082, 2
    %v1084 = vmax.f32 %v1082, %v1083
    %v1085 = vrot.slane %v1084, 1
    %v1086 = vmax.f32 %v1084, %v1085
    %v1087 = vsel %vm995, %v987, -inf
    %v1088 = vrot.slane %v1087, 4
    %v1089 = vmax.f32 %v1087, %v1088
    %v1090 = vrot.slane %v1089, 2
    %v1091 = vmax.f32 %v1089, %v1090
    %v1092 = vrot.slane %v1091, 1
    %v1093 = vmax.f32 %v1091, %v1092
    %v1094 = vsel %vm995, %v990, -inf
    %v1095 = vrot.slane %v1094, 4
    %v1096 = vmax.f32 %v1094, %v1095
    %v1097 = vrot.slane %v1096, 2
    %v1098 = vmax.f32 %v1096, %v1097
    %v1099 = vrot.slane %v1098, 1
    %v1100 = vmax.f32 %v1098, %v1099
    %v1101 = vsel %vm995, %v993, -inf
    %v1102 = vrot.slane %v1101, 4
    %v1103 = vmax.f32 %v1101, %v1102
    %v1104 = vrot.slane %v1103, 2
    %v1105 = vmax.f32 %v1103, %v1104
    %v1106 = vrot.slane %v1105, 1
    %v1107 = vmax.f32 %v1105, %v1106
    %v1108 = vsub.f32 %v948, %v1002
    %v1109 = vsub.f32 %v951, %v1009
    %v1110 = vsub.f32 %v954, %v1016
    %v1111 = vsub.f32 %v957, %v1023
    %v1112 = vsub.f32 %v960, %v1030
    %v1113 = vsub.f32 %v963, %v1037
    %v1114 = vsub.f32 %v966, %v1044
    %v1115 = vsub.f32 %v969, %v1051
    %v1116 = vsub.f32 %v972, %v1058
    %v1117 = vsub.f32 %v975, %v1065
    %v1118 = vsub.f32 %v978, %v1072
    %v1119 = vsub.f32 %v981, %v1079
    %v1120 = vsub.f32 %v984, %v1086
    %v1121 = vsub.f32 %v987, %v1093
    %v1122 = vsub.f32 %v990, %v1100
    %v1123 = vsub.f32 %v993, %v1107
    %v1124 = vmul.f32 %v1108, 1.442695
    %v1125 = vpow.pop %v1124
    %v1126 = vmul.f32 %v1109, 1.442695
    %v1127 = vpow.pop %v1126
    %v1128 = vmul.f32 %v1110, 1.442695
    %v1129 = vpow.pop %v1128
    %v1130 = vmul.f32 %v1111, 1.442695
    %v1131 = vpow.pop %v1130
    %v1132 = vmul.f32 %v1112, 1.442695
    %v1133 = vpow.pop %v1132
    %v1134 = vmul.f32 %v1113, 1.442695
    %v1135 = vpow.pop %v1134
    %v1136 = vmul.f32 %v1114, 1.442695
    %v1137 = vpow.pop %v1136
    %v1138 = vmul.f32 %v1115, 1.442695
    %v1139 = vpow.pop %v1138
    %v1140 = vmul.f32 %v1116, 1.442695
    %v1141 = vpow.pop %v1140
    %v1142 = vmul.f32 %v1117, 1.442695
    %v1143 = vpow.pop %v1142
    %v1144 = vmul.f32 %v1118, 1.442695
    %v1145 = vpow.pop %v1144
    %v1146 = vmul.f32 %v1119, 1.442695
    %v1147 = vpow.pop %v1146
    %v1148 = vmul.f32 %v1120, 1.442695
    %v1149 = vpow.pop %v1148
    %v1150 = vmul.f32 %v1121, 1.442695
    %v1151 = vpow.pop %v1150
    %v1152 = vmul.f32 %v1122, 1.442695
    %v1153 = vpow.pop %v1152
    %v1154 = vmul.f32 %v1123, 1.442695
    %v1155 = vpow.pop %v1154
    %v1156 = vsel %vm995, %v1125, 0.0
    %v1157 = vrot.slane %v1156, 4
    %v1158 = vadd.f32 %v1156, %v1157
    %v1159 = vrot.slane %v1158, 2
    %v1160 = vadd.f32 %v1158, %v1159
    %v1161 = vrot.slane %v1160, 1
    %v1162 = vadd.f32 %v1160, %v1161
    %v1163 = vsel %vm995, %v1127, 0.0
    %v1164 = vrot.slane %v1163, 4
    %v1165 = vadd.f32 %v1163, %v1164
    %v1166 = vrot.slane %v1165, 2
    %v1167 = vadd.f32 %v1165, %v1166
    %v1168 = vrot.slane %v1167, 1
    %v1169 = vadd.f32 %v1167, %v1168
    %v1170 = vsel %vm995, %v1129, 0.0
    %v1171 = vrot.slane %v1170, 4
    %v1172 = vadd.f32 %v1170, %v1171
    %v1173 = vrot.slane %v1172, 2
    %v1174 = vadd.f32 %v1172, %v1173
    %v1175 = vrot.slane %v1174, 1
    %v1176 = vadd.f32 %v1174, %v1175
    %v1177 = vsel %vm995, %v1131, 0.0
    %v1178 = vrot.slane %v1177, 4
    %v1179 = vadd.f32 %v1177, %v1178
    %v1180 = vrot.slane %v1179, 2
    %v1181 = vadd.f32 %v1179, %v1180
    %v1182 = vrot.slane %v1181, 1
    %v1183 = vadd.f32 %v1181, %v1182
    %v1184 = vsel %vm995, %v1133, 0.0
    %v1185 = vrot.slane %v1184, 4
    %v1186 = vadd.f32 %v1184, %v1185
    %v1187 = vrot.slane %v1186, 2
    %v1188 = vadd.f32 %v1186, %v1187
    %v1189 = vrot.slane %v1188, 1
    %v1190 = vadd.f32 %v1188, %v1189
    %v1191 = vsel %vm995, %v1135, 0.0
    %v1192 = vrot.slane %v1191, 4
    %v1193 = vadd.f32 %v1191, %v1192
    %v1194 = vrot.slane %v1193, 2
    %v1195 = vadd.f32 %v1193, %v1194
    %v1196 = vrot.slane %v1195, 1
    %v1197 = vadd.f32 %v1195, %v1196
    %v1198 = vsel %vm995, %v1137, 0.0
    %v1199 = vrot.slane %v1198, 4
    %v1200 = vadd.f32 %v1198, %v1199
    %v1201 = vrot.slane %v1200, 2
    %v1202 = vadd.f32 %v1200, %v1201
    %v1203 = vrot.slane %v1202, 1
    %v1204 = vadd.f32 %v1202, %v1203
    %v1205 = vsel %vm995, %v1139, 0.0
    %v1206 = vrot.slane %v1205, 4
    %v1207 = vadd.f32 %v1205, %v1206
    %v1208 = vrot.slane %v1207, 2
    %v1209 = vadd.f32 %v1207, %v1208
    %v1210 = vrot.slane %v1209, 1
    %v1211 = vadd.f32 %v1209, %v1210
    %v1212 = vsel %vm995, %v1141, 0.0
    %v1213 = vrot.slane %v1212, 4
    %v1214 = vadd.f32 %v1212, %v1213
    %v1215 = vrot.slane %v1214, 2
    %v1216 = vadd.f32 %v1214, %v1215
    %v1217 = vrot.slane %v1216, 1
    %v1218 = vadd.f32 %v1216, %v1217
    %v1219 = vsel %vm995, %v1143, 0.0
    %v1220 = vrot.slane %v1219, 4
    %v1221 = vadd.f32 %v1219, %v1220
    %v1222 = vrot.slane %v1221, 2
    %v1223 = vadd.f32 %v1221, %v1222
    %v1224 = vrot.slane %v1223, 1
    %v1225 = vadd.f32 %v1223, %v1224
    %v1226 = vsel %vm995, %v1145, 0.0
    %v1227 = vrot.slane %v1226, 4
    %v1228 = vadd.f32 %v1226, %v1227
    %v1229 = vrot.slane %v1228, 2
    %v1230 = vadd.f32 %v1228, %v1229
    %v1231 = vrot.slane %v1230, 1
    %v1232 = vadd.f32 %v1230, %v1231
    %v1233 = vsel %vm995, %v1147, 0.0
    %v1234 = vrot.slane %v1233, 4
    %v1235 = vadd.f32 %v1233, %v1234
    %v1236 = vrot.slane %v1235, 2
    %v1237 = vadd.f32 %v1235, %v1236
    %v1238 = vrot.slane %v1237, 1
    %v1239 = vadd.f32 %v1237, %v1238
    %v1240 = vsel %vm995, %v1149, 0.0
    %v1241 = vrot.slane %v1240, 4
    %v1242 = vadd.f32 %v1240, %v1241
    %v1243 = vrot.slane %v1242, 2
    %v1244 = vadd.f32 %v1242, %v1243
    %v1245 = vrot.slane %v1244, 1
    %v1246 = vadd.f32 %v1244, %v1245
    %v1247 = vsel %vm995, %v1151, 0.0
    %v1248 = vrot.slane %v1247, 4
    %v1249 = vadd.f32 %v1247, %v1248
    %v1250 = vrot.slane %v1249, 2
    %v1251 = vadd.f32 %v1249, %v1250
    %v1252 = vrot.slane %v1251, 1
    %v1253 = vadd.f32 %v1251, %v1252
    %v1254 = vsel %vm995, %v1153, 0.0
    %v1255 = vrot.slane %v1254, 4
    %v1256 = vadd.f32 %v1254, %v1255
    %v1257 = vrot.slane %v1256, 2
    %v1258 = vadd.f32 %v1256, %v1257
    %v1259 = vrot.slane %v1258, 1
    %v1260 = vadd.f32 %v1258, %v1259
    %v1261 = vsel %vm995, %v1155, 0.0
    %v1262 = vrot.slane %v1261, 4
    %v1263 = vadd.f32 %v1261, %v1262
    %v1264 = vrot.slane %v1263, 2
    %v1265 = vadd.f32 %v1263, %v1264
    %v1266 = vrot.slane %v1265, 1
    %v1267 = vadd.f32 %v1265, %v1266
    %v1268 = vrcp.pop %v1162
    %v1269 = vrcp.pop %v1169
    %v1270 = vrcp.pop %v1176
    %v1271 = vrcp.pop %v1183
    %v1272 = vrcp.pop %v1190
    %v1273 = vrcp.pop %v1197
    %v1274 = vrcp.pop %v1204
    %v1275 = vrcp.pop %v1211
    %v1276 = vrcp.pop %v1218
    %v1277 = vrcp.pop %v1225
    %v1278 = vrcp.pop %v1232
    %v1279 = vrcp.pop %v1239
    %v1280 = vrcp.pop %v1246
    %v1281 = vrcp.pop %v1253
    %v1282 = vrcp.pop %v1260
    %v1283 = vrcp.pop %v1267
    %v1284 = vmul.f32 %v1125, %v1268
    %v1285 = vmul.f32 %v1127, %v1269
    %v1286 = vmul.f32 %v1129, %v1270
    %v1287 = vmul.f32 %v1131, %v1271
    %v1288 = vmul.f32 %v1133, %v1272
    %v1289 = vmul.f32 %v1135, %v1273
    %v1290 = vmul.f32 %v1137, %v1274
    %v1291 = vmul.f32 %v1139, %v1275
    %v1292 = vmul.f32 %v1141, %v1276
    %v1293 = vmul.f32 %v1143, %v1277
    %v1294 = vmul.f32 %v1145, %v1278
    %v1295 = vmul.f32 %v1147, %v1279
    %v1296 = vmul.f32 %v1149, %v1280
    %v1297 = vmul.f32 %v1151, %v1281
    %v1298 = vmul.f32 %v1153, %v1282
    %v1299 = vmul.f32 %v1155, %v1283
    %v1300 = vld [vmem:[%s13] sm:$0xf]
    %v1302 = vsel %vm995, %v1284, 0
    %v1305 = vsel %vm995, %v1285, 0
    %v1308 = vsel %vm995, %v1286, 0
    %v1311 = vsel %vm995, %v1287, 0
    %v1314 = vsel %vm995, %v1288, 0
    %v1317 = vsel %vm995, %v1289, 0
    %v1320 = vsel %vm995, %v1290, 0
    %v1323 = vsel %vm995, %v1291, 0
    %v1326 = vsel %vm995, %v1292, 0
    %v1329 = vsel %vm995, %v1293, 0
    %v1332 = vsel %vm995, %v1294, 0
    %v1335 = vsel %vm995, %v1295, 0
    %v1338 = vsel %vm995, %v1296, 0
    %v1341 = vsel %vm995, %v1297, 0
    %v1344 = vsel %vm995, %v1298, 0
    %v1347 = vsel %vm995, %v1299, 0
    %vm1349 = vcmask 1043456
    %v1351 = vsel %vm1349, %v1300, 0
    %1353 = vmatpush.msra.mxu0 0.0
    %1354 = vmatpush.msra.mxu0 0.0
    %1355 = vmatpush.msra.mxu0 0.0
    %1356 = vmatpush.msra.mxu0 0.0
    %1357 = vmatpush.msra.mxu0 0.0
    %1358 = vmatpush.msra.mxu0 0.0
    %1359 = vmatpush.msra.mxu0 0.0
    %1360 = vmatpush.msra.mxu0 0.0
    %1361 = vmatpush.msra.mxu0 0.0
    %1362 = vmatpush.msra.mxu0 0.0
    %1363 = vmatpush.msra.mxu0 0.0
    %1364 = vmatpush.msra.mxu0 0.0
    %1365 = vmatpush.msra.mxu0 0.0
    %1366 = vmatpush.msra.mxu0 0.0
    %1367 = vmatpush.msra.mxu0 0.0
    %1368 = vmatpush.msra.mxu0 %v1351
    %1369 = vmatmul.f32.gmra.mxu0 %v1302
    %v1370 = vpop.f32.mrf.mxu0
    %v1371 = vadd.f32 0.0, %v1370
    %1372 = vmatmul.f32.gmra.mxu0 %v1305
    %v1373 = vpop.f32.mrf.mxu0
    %v1374 = vadd.f32 0.0, %v1373
    %1375 = vmatmul.f32.gmra.mxu0 %v1308
    %v1376 = vpop.f32.mrf.mxu0
    %v1377 = vadd.f32 0.0, %v1376
    %1378 = vmatmul.f32.gmra.mxu0 %v1311
    %v1379 = vpop.f32.mrf.mxu0
    %v1380 = vadd.f32 0.0, %v1379
    %1381 = vmatmul.f32.gmra.mxu0 %v1314
    %v1382 = vpop.f32.mrf.mxu0
    %v1383 = vadd.f32 0.0, %v1382
    %1384 = vmatmul.f32.gmra.mxu0 %v1317
    %v1385 = vpop.f32.mrf.mxu0
    %v1386 = vadd.f32 0.0, %v1385
    %1387 = vmatmul.f32.gmra.mxu0 %v1320
    %v1388 = vpop.f32.mrf.mxu0
    %v1389 = vadd.f32 0.0, %v1388
    %1390 = vmatmul.f32.gmra.mxu0 %v1323
    %v1391 = vpop.f32.mrf.mxu0
    %v1392 = vadd.f32 0.0, %v1391
    %1393 = vmatmul.f32.gmra.mxu0 %v1326
    %v1394 = vpop.f32.mrf.mxu0
    %v1395 = vadd.f32 0.0, %v1394
    %1396 = vmatmul.f32.gmra.mxu0 %v1329
    %v1397 = vpop.f32.mrf.mxu0
    %v1398 = vadd.f32 0.0, %v1397
    %1399 = vmatmul.f32.gmra.mxu0 %v1332
    %v1400 = vpop.f32.mrf.mxu0
    %v1401 = vadd.f32 0.0, %v1400
    %1402 = vmatmul.f32.gmra.mxu0 %v1335
    %v1403 = vpop.f32.mrf.mxu0
    %v1404 = vadd.f32 0.0, %v1403
    %1405 = vmatmul.f32.gmra.mxu0 %v1338
    %v1406 = vpop.f32.mrf.mxu0
    %v1407 = vadd.f32 0.0, %v1406
    %1408 = vmatmul.f32.gmra.mxu0 %v1341
    %v1409 = vpop.f32.mrf.mxu0
    %v1410 = vadd.f32 0.0, %v1409
    %1411 = vmatmul.f32.gmra.mxu0 %v1344
    %v1412 = vpop.f32.mrf.mxu0
    %v1413 = vadd.f32 0.0, %v1412
    %1414 = vmatmul.f32.gmra.mxu0 %v1347
    %v1415 = vpop.f32.mrf.mxu0
    %v1416 = vadd.f32 0.0, %v1415
    %1417 = vdwg.mxu0
    %v1418 = vmul.f32 %v1371, %v775
    %v1419 = vmul.f32 %v1374, %v777
    %v1420 = vmul.f32 %v1377, %v780
    %v1421 = vmul.f32 %v1380, %v782
    %v1422 = vmul.f32 %v1383, %v785
    %v1423 = vmul.f32 %v1386, %v787
    %v1424 = vmul.f32 %v1389, %v790
    %v1425 = vmul.f32 %v1392, %v792
    %v1426 = vmul.f32 %v1395, %v795
    %v1427 = vmul.f32 %v1398, %v797
    %v1428 = vmul.f32 %v1401, %v800
    %v1429 = vmul.f32 %v1404, %v802
    %v1430 = vmul.f32 %v1407, %v805
    %v1431 = vmul.f32 %v1410, %v807
    %v1432 = vmul.f32 %v1413, %v810
    %v1433 = vmul.f32 %v1416, %v812
    %v1434 = vsel %vm152, %v1418, 0.0
    %v1435 = vrot.slane %v1434, 4
    %v1436 = vadd.f32 %v1434, %v1435
    %v1437 = vrot.slane %v1436, 2
    %v1438 = vadd.f32 %v1436, %v1437
    %v1439 = vrot.slane %v1438, 1
    %v1440 = vadd.f32 %v1438, %v1439
    %v1441 = vsel %vm152, %v1419, 0.0
    %v1442 = vrot.slane %v1441, 4
    %v1443 = vadd.f32 %v1441, %v1442
    %v1444 = vrot.slane %v1443, 2
    %v1445 = vadd.f32 %v1443, %v1444
    %v1446 = vrot.slane %v1445, 1
    %v1447 = vadd.f32 %v1445, %v1446
    %v1448 = vsel %vm152, %v1420, 0.0
    %v1449 = vrot.slane %v1448, 4
    %v1450 = vadd.f32 %v1448, %v1449
    %v1451 = vrot.slane %v1450, 2
    %v1452 = vadd.f32 %v1450, %v1451
    %v1453 = vrot.slane %v1452, 1
    %v1454 = vadd.f32 %v1452, %v1453
    %v1455 = vsel %vm152, %v1421, 0.0
    %v1456 = vrot.slane %v1455, 4
    %v1457 = vadd.f32 %v1455, %v1456
    %v1458 = vrot.slane %v1457, 2
    %v1459 = vadd.f32 %v1457, %v1458
    %v1460 = vrot.slane %v1459, 1
    %v1461 = vadd.f32 %v1459, %v1460
    %v1462 = vsel %vm152, %v1422, 0.0
    %v1463 = vrot.slane %v1462, 4
    %v1464 = vadd.f32 %v1462, %v1463
    %v1465 = vrot.slane %v1464, 2
    %v1466 = vadd.f32 %v1464, %v1465
    %v1467 = vrot.slane %v1466, 1
    %v1468 = vadd.f32 %v1466, %v1467
    %v1469 = vsel %vm152, %v1423, 0.0
    %v1470 = vrot.slane %v1469, 4
    %v1471 = vadd.f32 %v1469, %v1470
    %v1472 = vrot.slane %v1471, 2
    %v1473 = vadd.f32 %v1471, %v1472
    %v1474 = vrot.slane %v1473, 1
    %v1475 = vadd.f32 %v1473, %v1474
    %v1476 = vsel %vm152, %v1424, 0.0
    %v1477 = vrot.slane %v1476, 4
    %v1478 = vadd.f32 %v1476, %v1477
    %v1479 = vrot.slane %v1478, 2
    %v1480 = vadd.f32 %v1478, %v1479
    %v1481 = vrot.slane %v1480, 1
    %v1482 = vadd.f32 %v1480, %v1481
    %v1483 = vsel %vm152, %v1425, 0.0
    %v1484 = vrot.slane %v1483, 4
    %v1485 = vadd.f32 %v1483, %v1484
    %v1486 = vrot.slane %v1485, 2
    %v1487 = vadd.f32 %v1485, %v1486
    %v1488 = vrot.slane %v1487, 1
    %v1489 = vadd.f32 %v1487, %v1488
    %v1490 = vsel %vm152, %v1426, 0.0
    %v1491 = vrot.slane %v1490, 4
    %v1492 = vadd.f32 %v1490, %v1491
    %v1493 = vrot.slane %v1492, 2
    %v1494 = vadd.f32 %v1492, %v1493
    %v1495 = vrot.slane %v1494, 1
    %v1496 = vadd.f32 %v1494, %v1495
    %v1497 = vsel %vm152, %v1427, 0.0
    %v1498 = vrot.slane %v1497, 4
    %v1499 = vadd.f32 %v1497, %v1498
    %v1500 = vrot.slane %v1499, 2
    %v1501 = vadd.f32 %v1499, %v1500
    %v1502 = vrot.slane %v1501, 1
    %v1503 = vadd.f32 %v1501, %v1502
    %v1504 = vsel %vm152, %v1428, 0.0
    %v1505 = vrot.slane %v1504, 4
    %v1506 = vadd.f32 %v1504, %v1505
    %v1507 = vrot.slane %v1506, 2
    %v1508 = vadd.f32 %v1506, %v1507
    %v1509 = vrot.slane %v1508, 1
    %v1510 = vadd.f32 %v1508, %v1509
    %v1511 = vsel %vm152, %v1429, 0.0
    %v1512 = vrot.slane %v1511, 4
    %v1513 = vadd.f32 %v1511, %v1512
    %v1514 = vrot.slane %v1513, 2
    %v1515 = vadd.f32 %v1513, %v1514
    %v1516 = vrot.slane %v1515, 1
    %v1517 = vadd.f32 %v1515, %v1516
    %v1518 = vsel %vm152, %v1430, 0.0
    %v1519 = vrot.slane %v1518, 4
    %v1520 = vadd.f32 %v1518, %v1519
    %v1521 = vrot.slane %v1520, 2
    %v1522 = vadd.f32 %v1520, %v1521
    %v1523 = vrot.slane %v1522, 1
    %v1524 = vadd.f32 %v1522, %v1523
    %v1525 = vsel %vm152, %v1431, 0.0
    %v1526 = vrot.slane %v1525, 4
    %v1527 = vadd.f32 %v1525, %v1526
    %v1528 = vrot.slane %v1527, 2
    %v1529 = vadd.f32 %v1527, %v1528
    %v1530 = vrot.slane %v1529, 1
    %v1531 = vadd.f32 %v1529, %v1530
    %v1532 = vsel %vm152, %v1432, 0.0
    %v1533 = vrot.slane %v1532, 4
    %v1534 = vadd.f32 %v1532, %v1533
    %v1535 = vrot.slane %v1534, 2
    %v1536 = vadd.f32 %v1534, %v1535
    %v1537 = vrot.slane %v1536, 1
    %v1538 = vadd.f32 %v1536, %v1537
    %v1539 = vsel %vm152, %v1433, 0.0
    %v1540 = vrot.slane %v1539, 4
    %v1541 = vadd.f32 %v1539, %v1540
    %v1542 = vrot.slane %v1541, 2
    %v1543 = vadd.f32 %v1541, %v1542
    %v1544 = vrot.slane %v1543, 1
    %v1545 = vadd.f32 %v1543, %v1544
    %v1546 = vld [vmem:[%s14] sm:$0xf]
    %v1547 = vld [vmem:[%s14 + $0x4] sm:$0xf]
    %v1548 = vld [vmem:[%s14 + $0x8] sm:$0xf]
    %v1549 = vld [vmem:[%s14 + $0xc] sm:$0xf]
    %v1550 = vpack.c.bf16 %v1440, %v1440
    %v1551 = vpack.c.bf16 %v1447, %v1447
    %v1552 = vpack.c.bf16 %v1454, %v1454
    %v1553 = vpack.c.bf16 %v1461, %v1461
    %v1554 = vpack.c.bf16 %v1468, %v1468
    %v1555 = vpack.c.bf16 %v1475, %v1475
    %v1556 = vpack.c.bf16 %v1482, %v1482
    %v1557 = vpack.c.bf16 %v1489, %v1489
    %v1558 = vpack.c.bf16 %v1496, %v1496
    %v1559 = vpack.c.bf16 %v1503, %v1503
    %v1560 = vpack.c.bf16 %v1510, %v1510
    %v1561 = vpack.c.bf16 %v1517, %v1517
    %v1562 = vpack.c.bf16 %v1524, %v1524
    %v1563 = vpack.c.bf16 %v1531, %v1531
    %v1564 = vpack.c.bf16 %v1538, %v1538
    %v1565 = vpack.c.bf16 %v1545, %v1545
    %v1566 = vld [vmem:[%s15] sm:$0x1]
    %v1568 = vperm.slane %v1566, 0
    %v1586 = vunpack.c.l.b16 %v1550
    %v1587 = vunpack.c.l.b16 %v1551
    %v1588 = vunpack.c.l.b16 %v1552
    %v1589 = vunpack.c.l.b16 %v1553
    %v1590 = vunpack.c.l.b16 %v1554
    %v1591 = vunpack.c.l.b16 %v1555
    %v1592 = vunpack.c.l.b16 %v1556
    %v1593 = vunpack.c.l.b16 %v1557
    %v1594 = vunpack.c.l.b16 %v1558
    %v1595 = vunpack.c.l.b16 %v1559
    %v1596 = vunpack.c.l.b16 %v1560
    %v1597 = vunpack.c.l.b16 %v1561
    %v1598 = vunpack.c.l.b16 %v1562
    %v1599 = vunpack.c.l.b16 %v1563
    %v1600 = vunpack.c.l.b16 %v1564
    %v1601 = vunpack.c.l.b16 %v1565
    %vm1602 = vcmask 1041409
    %v1603 = vsel %vm1602, %v1587, %v1586
    %vm1604 = vcmask 1042434
    %v1605 = vsel %vm1604, %v1588, %v1603
    %vm1606 = vcmask 1043459
    %v1607 = vsel %vm1606, %v1589, %v1605
    %vm1608 = vcmask 1044484
    %v1609 = vsel %vm1608, %v1590, %v1607
    %vm1610 = vcmask 1045509
    %v1611 = vsel %vm1610, %v1591, %v1609
    %vm1612 = vcmask 1046534
    %v1613 = vsel %vm1612, %v1592, %v1611
    %vm1614 = vcmask 1047559
    %v1615 = vsel %vm1614, %v1593, %v1613
    %v1616 = vsel %vm1602, %v1595, %v1594
    %v1617 = vsel %vm1604, %v1596, %v1616
    %v1618 = vsel %vm1606, %v1597, %v1617
    %v1619 = vsel %vm1608, %v1598, %v1618
    %v1620 = vsel %vm1610, %v1599, %v1619
    %v1621 = vsel %vm1612, %v1600, %v1620
    %v1622 = vsel %vm1614, %v1601, %v1621
    %v1623 = vpack.c.b16 %v1622, %v1615
    %v1628 = vunpack.c.l.b16 %v1546
    %v1629 = vunpack.c.l.b16 %v1547
    %v1630 = vunpack.c.l.b16 %v1548
    %v1631 = vunpack.c.l.b16 %v1549
    %v1632 = vpack.c.b16 %v1629, %v1628
    %v1633 = vpack.c.b16 %v1631, %v1630
    %v1637 = vsel %vm152, %v1623, 0
    %1639 = vmatpush.bf16.msra.mxu0 0
    %1640 = vmatpush.bf16.msra.mxu0 0
    %1641 = vmatpush.bf16.msra.mxu0 0
    %1642 = vmatpush.bf16.msra.mxu0 0
    %1643 = vmatpush.bf16.msra.mxu0 0
    %1644 = vmatpush.bf16.msra.mxu0 0
    %1645 = vmatpush.bf16.msra.mxu0 %v1633
    %1646 = vmatpush.bf16.msra.mxu0 %v1632
    %1647 = vmatmul.bf16.gmra.mxu0 %v1637
    %v1648 = vpop.f32.mrf.mxu0
    %v1649 = vadd.f32 %v1568, %v1648
    %v1650 = vpop.f32.mrf.mxu0
    %v1651 = vadd.f32 %v1568, %v1650
    %1652 = vdwg.mxu0
    %v1653 = vxor.u32 %v1649, 2147483648
    %v1654 = vxor.u32 %v1651, 2147483648
    %v1655 = vmul.f32 %v1653, 1.442695
    %v1656 = vpow.pop %v1655
    %v1657 = vmul.f32 %v1654, 1.442695
    %v1658 = vpow.pop %v1657
    %v1659 = vadd.f32 %v1656, 1.0
    %v1660 = vadd.f32 %v1658, 1.0
    %v1661 = vrcp.pop %v1659
    %v1662 = vmul.f32 %v1659, %v1661
    %v1663 = vsub.f32 1.0, %v1662
    %v1664 = vmul.f32 %v1661, %v1663
    %v1665 = vadd.f32 %v1661, %v1664
    %vm1666 = vweird.f32 %v1659
    %vm1667 = vweird.f32 %v1661
    %vm1668 = vmor %vm1666, %vm1667
    %v1669 = vsel %vm1668, %v1661, %v1665
    %v1670 = vand.u32 2147483647, %v1659
    %vm1671 = vcmp.eq.f32.partialorder %v1670, 8.507059e+37
    %v1672 = vand.u32 %v1659, 2147483648
    %v1673 = vor.u32 1.1754944e-38, %v1672
    %v1674 = vsel %vm1671, %v1673, %v1669
    %v1675 = vmul.f32 1.0, %v1674
    %v1676 = vrcp.pop %v1660
    %v1677 = vmul.f32 %v1660, %v1676
    %v1678 = vsub.f32 1.0, %v1677
    %v1679 = vmul.f32 %v1676, %v1678
    %v1680 = vadd.f32 %v1676, %v1679
    %vm1681 = vweird.f32 %v1660
    %vm1682 = vweird.f32 %v1676
    %vm1683 = vmor %vm1681, %vm1682
    %v1684 = vsel %vm1683, %v1676, %v1680
    %v1685 = vand.u32 2147483647, %v1660
    %vm1686 = vcmp.eq.f32.partialorder %v1685, 8.507059e+37
    %v1687 = vand.u32 %v1660, 2147483648
    %v1688 = vor.u32 1.1754944e-38, %v1687
    %v1689 = vsel %vm1686, %v1688, %v1684
    %v1690 = vmul.f32 1.0, %v1689
    %v1691 = vmul.f32 %v1649, %v1675
    %v1692 = vmul.f32 %v1651, %v1690
    %v1693 = vld [vmem:[%s20] sm:$0xf]
    %v1694 = vld [vmem:[%s20 + $0x4] sm:$0xf]
    %v1695 = vld [vmem:[%s20 + $0x8] sm:$0xf]
    %v1696 = vld [vmem:[%s20 + $0xc] sm:$0xf]
    %v1697 = vpack.c.bf16 %v1692, %v1691
    %v1698 = vld [vmem:[%s22] sm:$0x1]
    %v1700 = vperm.slane %v1698, 0
    %v1706 = vunpack.c.l.b16 %v1693
    %v1707 = vunpack.c.l.b16 %v1694
    %v1708 = vunpack.c.l.b16 %v1695
    %v1709 = vunpack.c.l.b16 %v1696
    %v1710 = vpack.c.b16 %v1707, %v1706
    %v1711 = vpack.c.b16 %v1709, %v1708
    %v1715 = vsel %vm152, %v1697, 0
    %1717 = vmatpush.bf16.msra.mxu0 0
    %1718 = vmatpush.bf16.msra.mxu0 0
    %1719 = vmatpush.bf16.msra.mxu0 0
    %1720 = vmatpush.bf16.msra.mxu0 0
    %1721 = vmatpush.bf16.msra.mxu0 0
    %1722 = vmatpush.bf16.msra.mxu0 0
    %1723 = vmatpush.bf16.msra.mxu0 %v1711
    %1724 = vmatpush.bf16.msra.mxu0 %v1710
    %1725 = vmatmul.bf16.gmra.mxu0 %v1715
    %v1726 = vpop.f32.mrf.mxu0
    %v1727 = vadd.f32 %v1700, %v1726
    %v1728 = vpop.f32.mrf.mxu0
    %v1729 = vadd.f32 %v1700, %v1728
    %1730 = vdwg.mxu0
    %v1731 = vld [vmem:[%s21] sm:$0xf]
    %v1732 = vld [vmem:[%s21 + $0x4] sm:$0xf]
    %v1733 = vld [vmem:[%s21 + $0x8] sm:$0xf]
    %v1734 = vld [vmem:[%s21 + $0xc] sm:$0xf]
    %v1735 = vpack.c.bf16 %v133, %v132
    %v1736 = vld [vmem:[%s23] sm:$0x1]
    %v1738 = vperm.slane %v1736, 0
    %v1744 = vunpack.c.l.b16 %v1731
    %v1745 = vunpack.c.l.b16 %v1732
    %v1746 = vunpack.c.l.b16 %v1733
    %v1747 = vunpack.c.l.b16 %v1734
    %v1748 = vpack.c.b16 %v1745, %v1744
    %v1749 = vpack.c.b16 %v1747, %v1746
    %v1753 = vsel %vm152, %v1735, 0
    %1755 = vmatpush.bf16.msra.mxu0 0
    %1756 = vmatpush.bf16.msra.mxu0 0
    %1757 = vmatpush.bf16.msra.mxu0 0
    %1758 = vmatpush.bf16.msra.mxu0 0
    %1759 = vmatpush.bf16.msra.mxu0 0
    %1760 = vmatpush.bf16.msra.mxu0 0
    %1761 = vmatpush.bf16.msra.mxu0 %v1749
    %1762 = vmatpush.bf16.msra.mxu0 %v1748
    %1763 = vmatmul.bf16.gmra.mxu0 %v1753
    %v1764 = vpop.f32.mrf.mxu0
    %v1765 = vadd.f32 %v1738, %v1764
    %v1766 = vpop.f32.mrf.mxu0
    %v1767 = vadd.f32 %v1738, %v1766
    %1768 = vdwg.mxu0
    %v1769 = vadd.f32 %v1727, %v1765
    %v1770 = vadd.f32 %v1729, %v1767
    %v1771 = vxor.u32 %v1769, 2147483648
    %v1772 = vxor.u32 %v1770, 2147483648
    %v1773 = vmul.f32 %v1771, 1.442695
    %v1774 = vpow.pop %v1773
    %v1775 = vmul.f32 %v1772, 1.442695
    %v1776 = vpow.pop %v1775
    %v1777 = vadd.f32 %v1774, 1.0
    %v1778 = vadd.f32 %v1776, 1.0
    %v1779 = vrcp.pop %v1777
    %v1780 = vmul.f32 %v1777, %v1779
    %v1781 = vsub.f32 1.0, %v1780
    %v1782 = vmul.f32 %v1779, %v1781
    %v1783 = vadd.f32 %v1779, %v1782
    %vm1784 = vweird.f32 %v1777
    %vm1785 = vweird.f32 %v1779
    %vm1786 = vmor %vm1784, %vm1785
    %v1787 = vsel %vm1786, %v1779, %v1783
    %v1788 = vand.u32 2147483647, %v1777
    %vm1789 = vcmp.eq.f32.partialorder %v1788, 8.507059e+37
    %v1790 = vand.u32 %v1777, 2147483648
    %v1791 = vor.u32 1.1754944e-38, %v1790
    %v1792 = vsel %vm1789, %v1791, %v1787
    %v1793 = vmul.f32 1.0, %v1792
    %v1794 = vrcp.pop %v1778
    %v1795 = vmul.f32 %v1778, %v1794
    %v1796 = vsub.f32 1.0, %v1795
    %v1797 = vmul.f32 %v1794, %v1796
    %v1798 = vadd.f32 %v1794, %v1797
    %vm1799 = vweird.f32 %v1778
    %vm1800 = vweird.f32 %v1794
    %vm1801 = vmor %vm1799, %vm1800
    %v1802 = vsel %vm1801, %v1794, %v1798
    %v1803 = vand.u32 2147483647, %v1778
    %vm1804 = vcmp.eq.f32.partialorder %v1803, 8.507059e+37
    %v1805 = vand.u32 %v1778, 2147483648
    %v1806 = vor.u32 1.1754944e-38, %v1805
    %v1807 = vsel %vm1804, %v1806, %v1802
    %v1808 = vmul.f32 1.0, %v1807
    %1811 = vrot.lane.b32.xlu0 %v1765, 64
    %v1812 = vpop.permute.xlu0 %1811
    %1813 = vrot.lane.b32.xlu0 %v1767, 64
    %v1814 = vpop.permute.xlu0 %1813
    %v1817 = vmul.f32 %v1793, %v1812
    %v1818 = vmul.f32 %v1808, %v1814
    %1821 = vrot.lane.b32.xlu0 %v1817, 64
    %v1822 = vpop.permute.xlu0 %1821
    %1823 = vrot.lane.b32.xlu0 %v1818, 64
    %v1824 = vpop.permute.xlu0 %1823
    %v1827 = vadd.f32 %v1727, %v1822
    %v1828 = vadd.f32 %v1729, %v1824
    %v1829 = vtanh.pop %v1827
    %v1830 = vtanh.pop %v1828
    %v1831 = vsub.f32 1.0, %v1793
    %v1832 = vsub.f32 1.0, %v1808
    %1835 = vrot.lane.b32.xlu0 %v1829, 96
    %v1836 = vpop.permute.xlu0 %1835
    %1837 = vrot.lane.b32.xlu0 %v1830, 96
    %v1838 = vpop.permute.xlu0 %1837
    %v1841 = vmul.f32 %v1831, %v1836
    %v1842 = vmul.f32 %v1832, %v1838
    %1845 = vrot.lane.b32.xlu0 %v132, 32
    %v1846 = vpop.permute.xlu0 %1845
    %1847 = vrot.lane.b32.xlu0 %v133, 32
    %v1848 = vpop.permute.xlu0 %1847
    %v1851 = vmul.f32 %v1793, %v1846
    %v1852 = vmul.f32 %v1808, %v1848
    %v1853 = vadd.f32 %v1841, %v1851
    %v1854 = vadd.f32 %v1842, %v1852
    %v1855 = vld [vmem:[%s16] sm:$0x1]
    %v1856 = vld [vmem:[%s17] sm:$0x1]
    %1859 = vrot.lane.b32.xlu0 %v1853, 96
    %v1860 = vpop.permute.xlu0 %1859
    %1861 = vrot.lane.b32.xlu0 %v1854, 96
    %v1862 = vpop.permute.xlu0 %1861
    %v1865 = vsel %vm152, %v1860, 0.0
    %1866 = vadd.xlane.f32.xlu0 %v1865
    %v1867 = vpop.xlane.xlu0 %1866
    %v1868 = vsel %vm152, %v1862, 0.0
    %1869 = vadd.xlane.f32.xlu0 %v1868
    %v1870 = vpop.xlane.xlu0 %1869
    %v1871 = vmul.f32 %v1867, %v165
    %v1872 = vmul.f32 %v1870, %v165
    %v1873 = vsub.f32 %v1853, %v1871
    %v1874 = vsub.f32 %v1854, %v1872
    %v1875 = vmul.f32 %v1873, %v1873
    %v1876 = vmul.f32 %v1874, %v1874
    %1879 = vrot.lane.b32.xlu0 %v1875, 96
    %v1880 = vpop.permute.xlu0 %1879
    %1881 = vrot.lane.b32.xlu0 %v1876, 96
    %v1882 = vpop.permute.xlu0 %1881
    %v1885 = vsel %vm152, %v1880, 0.0
    %1886 = vadd.xlane.f32.xlu0 %v1885
    %v1887 = vpop.xlane.xlu0 %1886
    %v1888 = vsel %vm152, %v1882, 0.0
    %1889 = vadd.xlane.f32.xlu0 %v1888
    %v1890 = vpop.xlane.xlu0 %1889
    %v1891 = vmul.f32 %v1887, %v165
    %v1892 = vmul.f32 %v1890, %v165
    %v1893 = vadd.f32 %v1891, 1e-05
    %v1894 = vadd.f32 %v1892, 1e-05
    %v1895 = vrsqrt.pop %v1893
    %v1896 = vmul.f32 %v1895, %v1893
    %v1897 = vmul.f32 %v1896, %v1895
    %v1898 = vmul.f32 0.5, %v1897
    %v1899 = vsub.f32 1.5, %v1898
    %v1900 = vmul.f32 %v1895, %v1899
    %vm1901 = vweird.f32 %v1893
    %vm1902 = vweird.f32 %v1895
    %vm1903 = vmor %vm1901, %vm1902
    %v1904 = vsel %vm1903, %v1895, %v1900
    %v1905 = vrsqrt.pop %v1894
    %v1906 = vmul.f32 %v1905, %v1894
    %v1907 = vmul.f32 %v1906, %v1905
    %v1908 = vmul.f32 0.5, %v1907
    %v1909 = vsub.f32 1.5, %v1908
    %v1910 = vmul.f32 %v1905, %v1909
    %vm1911 = vweird.f32 %v1894
    %vm1912 = vweird.f32 %v1905
    %vm1913 = vmor %vm1911, %vm1912
    %v1914 = vsel %vm1913, %v1905, %v1910
    %v1915 = vmul.f32 %v1873, %v1904
    %v1916 = vmul.f32 %v1874, %v1914
    %v1918 = vperm.slane %v1855, 0
    %1919 = vrot.lane.b32.xlu0 %v1918, 32
    %v1920 = vpop.permute.xlu0 %1919
    %v1922 = vmul.f32 %v1915, %v1920
    %v1923 = vmul.f32 %v1916, %v1920
    %v1925 = vperm.slane %v1856, 0
    %1926 = vrot.lane.b32.xlu0 %v1925, 32
    %v1927 = vpop.permute.xlu0 %1926
    %v1929 = vadd.f32 %v1922, %v1927
    %v1930 = vadd.f32 %v1923, %v1927
    %v1931 = vld [vmem:[%s18] sm:$0xf]
    %v1932 = vld [vmem:[%s18 + $0x4] sm:$0xf]
    %v1933 = vld [vmem:[%s18 + $0x8] sm:$0xf]
    %v1934 = vld [vmem:[%s18 + $0xc] sm:$0xf]
    %v1935 = vpack.c.bf16 %v1930, %v1929
    %v1936 = vld [vmem:[%s19] sm:$0x1]
    %v1938 = vperm.slane %v1936, 0
    %1941 = vrot.lane.b32.xlu0 %v1935, 96
    %v1942 = vpop.permute.xlu0 %1941
    %v1947 = vunpack.c.l.b16 %v1931
    %v1948 = vunpack.c.l.b16 %v1932
    %v1949 = vunpack.c.l.b16 %v1933
    %v1950 = vunpack.c.l.b16 %v1934
    %v1951 = vpack.c.b16 %v1948, %v1947
    %v1952 = vpack.c.b16 %v1950, %v1949
    %v1956 = vsel %vm152, %v1942, 0
    %1958 = vmatpush.bf16.msra.mxu0 0
    %1959 = vmatpush.bf16.msra.mxu0 0
    %1960 = vmatpush.bf16.msra.mxu0 0
    %1961 = vmatpush.bf16.msra.mxu0 0
    %1962 = vmatpush.bf16.msra.mxu0 0
    %1963 = vmatpush.bf16.msra.mxu0 0
    %1964 = vmatpush.bf16.msra.mxu0 %v1952
    %1965 = vmatpush.bf16.msra.mxu0 %v1951
    %1966 = vmatmul.bf16.gmra.mxu0 %v1956
    %v1967 = vpop.f32.mrf.mxu0
    %v1968 = vadd.f32 %v1938, %v1967
    %v1969 = vpop.f32.mrf.mxu0
    %v1970 = vadd.f32 %v1938, %v1969
    %1971 = vdwg.mxu0
    %v1972 = vxor.u32 %v1968, 2147483648
    %v1973 = vxor.u32 %v1970, 2147483648
    %v1974 = vmul.f32 %v1972, 1.442695
    %v1975 = vpow.pop %v1974
    %v1976 = vmul.f32 %v1973, 1.442695
    %v1977 = vpow.pop %v1976
    %v1978 = vadd.f32 %v1975, 1.0
    %v1979 = vadd.f32 %v1977, 1.0
    %v1980 = vrcp.pop %v1978
    %v1981 = vmul.f32 %v1978, %v1980
    %v1982 = vsub.f32 1.0, %v1981
    %v1983 = vmul.f32 %v1980, %v1982
    %v1984 = vadd.f32 %v1980, %v1983
    %vm1985 = vweird.f32 %v1978
    %vm1986 = vweird.f32 %v1980
    %vm1987 = vmor %vm1985, %vm1986
    %v1988 = vsel %vm1987, %v1980, %v1984
    %v1989 = vand.u32 2147483647, %v1978
    %vm1990 = vcmp.eq.f32.partialorder %v1989, 8.507059e+37
    %v1991 = vand.u32 %v1978, 2147483648
    %v1992 = vor.u32 1.1754944e-38, %v1991
    %v1993 = vsel %vm1990, %v1992, %v1988
    %v1994 = vmul.f32 1.0, %v1993
    %v1995 = vrcp.pop %v1979
    %v1996 = vmul.f32 %v1979, %v1995
    %v1997 = vsub.f32 1.0, %v1996
    %v1998 = vmul.f32 %v1995, %v1997
    %v1999 = vadd.f32 %v1995, %v1998
    %vm2000 = vweird.f32 %v1979
    %vm2001 = vweird.f32 %v1995
    %vm2002 = vmor %vm2000, %vm2001
    %v2003 = vsel %vm2002, %v1995, %v1999
    %v2004 = vand.u32 2147483647, %v1979
    %vm2005 = vcmp.eq.f32.partialorder %v2004, 8.507059e+37
    %v2006 = vand.u32 %v1979, 2147483648
    %v2007 = vor.u32 1.1754944e-38, %v2006
    %v2008 = vsel %vm2005, %v2007, %v2003
    %v2009 = vmul.f32 1.0, %v2008
    %v2010 = vmul.f32 %v1968, %v1994
    %v2011 = vmul.f32 %v1970, %v2009
    %v2012 = vld [vmem:[%s24] sm:$0xf]
    %v2013 = vld [vmem:[%s24 + $0x4] sm:$0xf]
    %v2014 = vld [vmem:[%s24 + $0x8] sm:$0xf]
    %v2015 = vld [vmem:[%s24 + $0xc] sm:$0xf]
    %v2016 = vpack.c.bf16 %v2011, %v2010
    %v2017 = vld [vmem:[%s26] sm:$0x1]
    %v2019 = vperm.slane %v2017, 0
    %v2025 = vunpack.c.l.b16 %v2012
    %v2026 = vunpack.c.l.b16 %v2013
    %v2027 = vunpack.c.l.b16 %v2014
    %v2028 = vunpack.c.l.b16 %v2015
    %v2029 = vpack.c.b16 %v2026, %v2025
    %v2030 = vpack.c.b16 %v2028, %v2027
    %v2034 = vsel %vm152, %v2016, 0
    %2036 = vmatpush.bf16.msra.mxu0 0
    %2037 = vmatpush.bf16.msra.mxu0 0
    %2038 = vmatpush.bf16.msra.mxu0 0
    %2039 = vmatpush.bf16.msra.mxu0 0
    %2040 = vmatpush.bf16.msra.mxu0 0
    %2041 = vmatpush.bf16.msra.mxu0 0
    %2042 = vmatpush.bf16.msra.mxu0 %v2030
    %2043 = vmatpush.bf16.msra.mxu0 %v2029
    %2044 = vmatmul.bf16.gmra.mxu0 %v2034
    %v2045 = vpop.f32.mrf.mxu0
    %v2046 = vadd.f32 %v2019, %v2045
    %v2047 = vpop.f32.mrf.mxu0
    %v2048 = vadd.f32 %v2019, %v2047
    %2049 = vdwg.mxu0
    %v2050 = vld [vmem:[%s25] sm:$0xf]
    %v2051 = vld [vmem:[%s25 + $0x4] sm:$0xf]
    %v2052 = vld [vmem:[%s25 + $0x8] sm:$0xf]
    %v2053 = vld [vmem:[%s25 + $0xc] sm:$0xf]
    %v2054 = vpack.c.bf16 %v1854, %v1853
    %v2055 = vld [vmem:[%s27] sm:$0x1]
    %v2057 = vperm.slane %v2055, 0
    %2060 = vrot.lane.b32.xlu0 %v2054, 96
    %v2061 = vpop.permute.xlu0 %2060
    %v2066 = vunpack.c.l.b16 %v2050
    %v2067 = vunpack.c.l.b16 %v2051
    %v2068 = vunpack.c.l.b16 %v2052
    %v2069 = vunpack.c.l.b16 %v2053
    %v2070 = vpack.c.b16 %v2067, %v2066
    %v2071 = vpack.c.b16 %v2069, %v2068
    %v2075 = vsel %vm152, %v2061, 0
    %2077 = vmatpush.bf16.msra.mxu0 0
    %2078 = vmatpush.bf16.msra.mxu0 0
    %2079 = vmatpush.bf16.msra.mxu0 0
    %2080 = vmatpush.bf16.msra.mxu0 0
    %2081 = vmatpush.bf16.msra.mxu0 0
    %2082 = vmatpush.bf16.msra.mxu0 0
    %2083 = vmatpush.bf16.msra.mxu0 %v2071
    %2084 = vmatpush.bf16.msra.mxu0 %v2070
    %2085 = vmatmul.bf16.gmra.mxu0 %v2075
    %v2086 = vpop.f32.mrf.mxu0
    %v2087 = vadd.f32 %v2057, %v2086
    %v2088 = vpop.f32.mrf.mxu0
    %v2089 = vadd.f32 %v2057, %v2088
    %2090 = vdwg.mxu0
    %v2091 = vadd.f32 %v2046, %v2087
    %v2092 = vadd.f32 %v2048, %v2089
    %v2093 = vxor.u32 %v2091, 2147483648
    %v2094 = vxor.u32 %v2092, 2147483648
    %v2095 = vmul.f32 %v2093, 1.442695
    %v2096 = vpow.pop %v2095
    %v2097 = vmul.f32 %v2094, 1.442695
    %v2098 = vpow.pop %v2097
    %v2099 = vadd.f32 %v2096, 1.0
    %v2100 = vadd.f32 %v2098, 1.0
    %v2101 = vrcp.pop %v2099
    %v2102 = vmul.f32 %v2099, %v2101
    %v2103 = vsub.f32 1.0, %v2102
    %v2104 = vmul.f32 %v2101, %v2103
    %v2105 = vadd.f32 %v2101, %v2104
    %vm2106 = vweird.f32 %v2099
    %vm2107 = vweird.f32 %v2101
    %vm2108 = vmor %vm2106, %vm2107
    %v2109 = vsel %vm2108, %v2101, %v2105
    %v2110 = vand.u32 2147483647, %v2099
    %vm2111 = vcmp.eq.f32.partialorder %v2110, 8.507059e+37
    %v2112 = vand.u32 %v2099, 2147483648
    %v2113 = vor.u32 1.1754944e-38, %v2112
    %v2114 = vsel %vm2111, %v2113, %v2109
    %v2115 = vmul.f32 1.0, %v2114
    %v2116 = vrcp.pop %v2100
    %v2117 = vmul.f32 %v2100, %v2116
    %v2118 = vsub.f32 1.0, %v2117
    %v2119 = vmul.f32 %v2116, %v2118
    %v2120 = vadd.f32 %v2116, %v2119
    %vm2121 = vweird.f32 %v2100
    %vm2122 = vweird.f32 %v2116
    %vm2123 = vmor %vm2121, %vm2122
    %v2124 = vsel %vm2123, %v2116, %v2120
    %v2125 = vand.u32 2147483647, %v2100
    %vm2126 = vcmp.eq.f32.partialorder %v2125, 8.507059e+37
    %v2127 = vand.u32 %v2100, 2147483648
    %v2128 = vor.u32 1.1754944e-38, %v2127
    %v2129 = vsel %vm2126, %v2128, %v2124
    %v2130 = vmul.f32 1.0, %v2129
    %2133 = vrot.lane.b32.xlu0 %v2087, 64
    %v2134 = vpop.permute.xlu0 %2133
    %2135 = vrot.lane.b32.xlu0 %v2089, 64
    %v2136 = vpop.permute.xlu0 %2135
    %v2139 = vmul.f32 %v2115, %v2134
    %v2140 = vmul.f32 %v2130, %v2136
    %2143 = vrot.lane.b32.xlu0 %v2139, 64
    %v2144 = vpop.permute.xlu0 %2143
    %2145 = vrot.lane.b32.xlu0 %v2140, 64
    %v2146 = vpop.permute.xlu0 %2145
    %v2149 = vadd.f32 %v2046, %v2144
    %v2150 = vadd.f32 %v2048, %v2146
    %v2151 = vtanh.pop %v2149
    %v2152 = vtanh.pop %v2150
    %v2153 = vsub.f32 1.0, %v2115
    %v2154 = vsub.f32 1.0, %v2130
    %2157 = vrot.lane.b32.xlu0 %v2151, 96
    %v2158 = vpop.permute.xlu0 %2157
    %2159 = vrot.lane.b32.xlu0 %v2152, 96
    %v2160 = vpop.permute.xlu0 %2159
    %v2163 = vmul.f32 %v2153, %v2158
    %v2164 = vmul.f32 %v2154, %v2160
    %v2165 = vmul.f32 %v2115, %v1853
    %v2166 = vmul.f32 %v2130, %v1854
    %v2167 = vadd.f32 %v2163, %v2165
    %v2168 = vadd.f32 %v2164, %v2166
    %2171 = vrot.lane.b32.xlu0 %v2167, 96
    %v2172 = vpop.permute.xlu0 %2171
    %2173 = vrot.lane.b32.xlu0 %v2168, 96
    %v2174 = vpop.permute.xlu0 %2173
    %2177 = vst.msk [vmem:[#allocation8] sm:$0xff] %vm152, %v2172
    %2178 = vst.msk [vmem:[#allocation8 + $0x8] sm:$0xff] %vm152, %v2174
    // Predicated region
    $region126: #{tpu_custom_call.1} parent=1 // pred_check
      _
    $region127: #{tpu_custom_call.1} parent=1 // pred_check_branch
      %2180 = sbr.rel (0) target = $region129
    $region128: #{tpu_custom_call.1} parent=1 // pred_region
      %2182 = vsyncadd [#allocation4], 0
      %s2183 = sshll.u32 [#allocation8], 4
      %s2184 = int_to_ptr.vmem [resolvable:$true] %s2183
      %s2185 = sshll.u32 %s28, 4
      %s2186 = int_to_ptr.hbm [resolvable:$true] %s2185
      %2191 = dma.vmem_to_hbm [thread:$0]  %s2184, 256, %s2186, [#allocation4], 128, 128, 8
    $region129: #{tpu_custom_call.1} parent=1 // pred_fallthru
      _
    // Predicated region
    $region130: #{tpu_custom_call.1} parent=1 // pred_check
      _
    $region131: #{tpu_custom_call.1} parent=1 // pred_check_branch
      %2193 = sbr.rel (0) target = $region133
    $region132: #{tpu_custom_call.1} parent=1 // pred_region
      %2195 = dma.done [#allocation4], 256
    $region133: #{tpu_custom_call.1} parent=1 // pred_fallthru
      _
    %2196 = vsyncpa [#allocation3], 1
    %2197 = vsyncpa [#allocation6], 1
    %2198 = vsyncpa [#allocation4], 1

</llo_original>
